<compile_context>
chip_gen: v6e
topology: v6e:2x2x1
jax: 0.10.0
libtpu: 0.0.40
codegen_flags: <defaults>
</compile_context>

<pallas_src>
import jax
import jax.numpy as jnp
from jax import lax
from jax.experimental import pallas as pl
from jax.experimental.pallas import tpu as pltpu


def _round_up(x, m):
    return ((x + m - 1) // m) * m


def _choose_bt(batch):
    # Prefer grouping several batch elements per grid step (more bytes/step),
    # but keep >= 2 blocks on the leading "parallel" axis so megacore (v7x)
    # can shard the grid across both TensorCores.
    for bt in (16, 8, 4, 2):
        if batch % bt == 0 and batch // bt >= 2:
            return bt
    return 1


def _make_gram_kernel(n_samples, tn, kk, needs_mask):
    def kernel(x_ref, y_ref, oxx_ref, oxy_ref, osx_ref, osy_ref):
        s = pl.program_id(1)   # sample-axis parallel split (megacore when bb == 1)
        k = pl.program_id(2)   # sample-axis reduction step

        @pl.when(k == 0)
        def _init():
            oxx_ref[...] = jnp.zeros_like(oxx_ref)
            oxy_ref[...] = jnp.zeros_like(oxy_ref)
            osx_ref[...] = jnp.zeros_like(osx_ref)
            osy_ref[...] = jnp.zeros_like(osy_ref)

        x = x_ref[...]   # (bt, D, tn)  -- samples on the lane axis (lane-dense)
        y = y_ref[...]   # (bt, O, tn)

        if needs_mask:
            # Only the partial trailing tile carries garbage lanes (no HBM pad);
            # zero them so they contribute nothing to the Gram / column sums.
            col = (s * kk + k) * tn + lax.broadcasted_iota(jnp.int32, (1, 1, tn), 2)
            valid = col < n_samples
            x = jnp.where(valid, x, jnp.float32(0.0))
            y = jnp.where(valid, y, jnp.float32(0.0))

        # Contract over the sample (lane) axis, batch over bt — the standard
        # "q @ k^T" MXU pattern.  Only the needed X^T X / X^T Y blocks are
        # computed (no wasted Y^T Y work).
        dn = (((2,), (2,)), ((0,), (0,)))
        oxx_ref[...] += lax.dot_general(
            x, x, dn, precision=lax.Precision.HIGHEST,
            preferred_element_type=jnp.float32)
        oxy_ref[...] += lax.dot_general(
            x, y, dn, precision=lax.Precision.HIGHEST,
            preferred_element_type=jnp.float32)
        # Column sums: lane reductions -> XLU slot (essentially free next to DMA).
        osx_ref[...] += jnp.sum(x, axis=2, keepdims=True)
        osy_ref[...] += jnp.sum(y, axis=2, keepdims=True)

    return kernel


def ridge_regressor_forward(reprs, y, lambda_param=0.0, reg_coeff=None, tile_n=4096):
    """Training-mode forward of RidgeRegressor.

    reprs: (B, N, D) float32, y: (B, N, O) float32.
    Returns (w, b) with w: (B, D, O) and b: (B, 1, O).
    """
    reprs = reprs.astype(jnp.float32)
    y = y.astype(jnp.float32)
    batch, n_samples, n_dim = reprs.shape
    n_out = y.shape[-1]
    d1 = n_dim + 1

    # TODO(synk): n_samples < n_dim (Woodbury) branch not implemented.
    assert n_samples >= n_dim
    # TODO(synk): eval-mode mask-based row selection (data-dependent gather)
    # not implemented; this is the training-mode path.

    if reg_coeff is None:
        reg_coeff = jax.nn.softplus(jnp.asarray(lambda_param, jnp.float32))
    reg = jnp.asarray(reg_coeff, jnp.float32)

    # Lane-dense layout: one extra XLA transpose pass over the inputs buys
    # dense (multiple-of-128) lane tiles in VMEM — ~16x smaller tiles than the
    # (B, N, D) layout at small D, so per-step DMAs can be grown well past the
    # ~0.35 us pipeline overhead on v5e/v6e/v7x.
    # TODO(synk): for n_dim >= 128 the untransposed layout is already
    # lane-dense and would avoid this extra pass.
    xt = jnp.swapaxes(reprs, 1, 2)   # (B, D, N)
    yt = jnp.swapaxes(y, 1, 2)       # (B, O, N)

    # --- Tile sizes (explicit VMEM budgeting) -------------------------------
    bt = _choose_bt(batch)
    dp = _round_up(n_dim, 8)    # sublane-padded feature rows
    op = _round_up(n_out, 8)

    tn_target = max(128, (int(tile_n) // 128) * 128)
    budget = 24 * 1024 * 1024   # double-buffered input bytes; safe on all gens
    while 2 * bt * tn_target * (dp + op) * 4 > budget and tn_target > 512:
        tn_target //= 2
    while 2 * bt * tn_target * (dp + op) * 4 > budget and bt > 1:
        bt //= 2

    if n_samples <= tn_target:
        tn = n_samples           # single full-axis tile (any extent is legal)
        num_k = 1
        needs_mask = False
    else:
        tn = 0
        for cand in range(tn_target, 0, -128):
            if n_samples % cand == 0:
                tn = cand
                break
        if tn >= max(128, tn_target // 2):
            num_k = n_samples // tn          # exact tiling, no mask needed
            needs_mask = False
        else:
            tn = tn_target                   # masked partial trailing tile
            num_k = pl.cdiv(n_samples, tn)
            needs_mask = (n_samples % tn) != 0

    bb = batch // bt
    # Megacore (v7x): with a single batch block, split the sample axis into 2
    # parallel partial Grams (summed in the wrapper) so both TCs get work.
    ns = 2 if (bb == 1 and num_k >= 2 and num_k % 2 == 0) else 1
    kk = num_k // ns

    kernel = _make_gram_kernel(n_samples, tn, kk, needs_mask)

    buf_bytes = 2 * bt * tn * (dp + op) * 4
    vmem_limit = int(min(48 * 1024 * 1024, max(32 * 1024 * 1024, buf_bytes + 8 * 1024 * 1024)))

    cost = pl.CostEstimate(
        flops=int(2 * batch * n_samples * n_dim * (n_dim + n_out)),
        transcendentals=0,
        bytes_accessed=int(4 * batch * n_samples * (n_dim + n_out)
                           + 4 * ns * batch * n_dim * (n_dim + n_out + 2)),
    )

    oxx, oxy, osx, osy = pl.pallas_call(
        kernel,
        out_shape=(
            jax.ShapeDtypeStruct((ns, batch, n_dim, n_dim), jnp.float32),
            jax.ShapeDtypeStruct((ns, batch, n_dim, n_out), jnp.float32),
            jax.ShapeDtypeStruct((ns, batch, n_dim, 1), jnp.float32),
            jax.ShapeDtypeStruct((ns, batch, n_out, 1), jnp.float32),
        ),
        grid=(bb, ns, kk),
        in_specs=[
            pl.BlockSpec((bt, n_dim, tn), lambda b, s, k: (b, 0, s * kk + k)),
            pl.BlockSpec((bt, n_out, tn), lambda b, s, k: (b, 0, s * kk + k)),
        ],
        out_specs=(
            pl.BlockSpec((None, bt, n_dim, n_dim), lambda b, s, k: (s, b, 0, 0)),
            pl.BlockSpec((None, bt, n_dim, n_out), lambda b, s, k: (s, b, 0, 0)),
            pl.BlockSpec((None, bt, n_dim, 1), lambda b, s, k: (s, b, 0, 0)),
            pl.BlockSpec((None, bt, n_out, 1), lambda b, s, k: (s, b, 0, 0)),
        ),
        compiler_params=pltpu.CompilerParams(
            dimension_semantics=("parallel", "parallel", "arbitrary"),
            vmem_limit_bytes=vmem_limit),
        cost_estimate=cost,
    )(xt, yt)

    # --- Assemble normal equations in the wrapper (tiny) --------------------
    xx = jnp.sum(oxx, axis=0)                 # (B, D, D)
    xy = jnp.sum(oxy, axis=0)                 # (B, D, O)
    sx = jnp.sum(osx, axis=0)                 # (B, D, 1)
    sy = jnp.sum(osy, axis=0)                 # (B, O, 1)
    cnt = jnp.full((batch, 1, 1), float(n_samples), dtype=jnp.float32)

    a_top = jnp.concatenate([xx, sx], axis=2)                          # (B, D, D+1)
    a_bot = jnp.concatenate([jnp.swapaxes(sx, 1, 2), cnt], axis=2)     # (B, 1, D+1)
    a_mat = jnp.concatenate([a_top, a_bot], axis=1)                    # (B, D+1, D+1)
    a_mat = a_mat + reg * jnp.eye(d1, dtype=jnp.float32)

    b_mat = jnp.concatenate([xy, jnp.swapaxes(sy, 1, 2)], axis=1)      # (B, D+1, O)

    # TODO(synk): dense LU solve has no Pallas primitive; done in plain JAX.
    weights = jnp.linalg.solve(a_mat, b_mat)   # (B, D+1, O)
    return weights[:, :-1], weights[:, -1:]


def _reference_forward(reprs, y, lambda_param=0.0):
    reg = jax.nn.softplus(jnp.asarray(lambda_param, jnp.float32))
    batch, n_samples, n_dim = reprs.shape
    ones = jnp.ones((batch, n_samples, 1), jnp.float32)
    x_ext = jnp.concatenate([reprs, ones], axis=-1)
    a = jnp.einsum("bnd,bne->bde", x_ext, x_ext, precision=lax.Precision.HIGHEST)
    a = a + reg * jnp.eye(n_dim + 1, dtype=jnp.float32)
    b = jnp.einsum("bnd,bno->bdo", x_ext, y, precision=lax.Precision.HIGHEST)
    w = jnp.linalg.solve(a, b)
    return w[:, :-1], w[:, -1:]


if __name__ == "__main__":
    key = jax.random.PRNGKey(0)
    ks = jax.random.split(key, 8)

    # nn.Parameter lambda_init = 0.0 (deterministic init per module __init__)
    lambda_param = 0.0

    def check(w, b, w_ref, b_ref):
        assert jnp.allclose(w, w_ref, atol=1e-3, rtol=1e-3)
        assert jnp.allclose(b, b_ref, atol=1e-3, rtol=1e-3)

    # Case 1: multi-step sample-axis accumulation, 2 parallel batch blocks.
    batch, n, d, o = 2, 256, 8, 4
    x1 = jax.random.normal(ks[0], (batch, n, d), dtype=jnp.float32)
    y1 = jax.random.normal(ks[1], (batch, n, o), dtype=jnp.float32)
    w1, b1 = ridge_regressor_forward(x1, y1, lambda_param=lambda_param, tile_n=128)
    jax.block_until_ready((w1, b1))
    assert w1.shape == (batch, d, o) and b1.shape == (batch, 1, o)
    check(w1, b1, *_reference_forward(x1, y1, lambda_param))

    # Case 2: small ragged n_samples -> single full-axis tile, no pad, no mask.
    x2 = jax.random.normal(ks[2], (batch, 20, d), dtype=jnp.float32)
    y2 = jax.random.normal(ks[3], (batch, 20, o), dtype=jnp.float32)
    w2, b2 = ridge_regressor_forward(x2, y2, lambda_param=lambda_param)
    jax.block_until_ready((w2, b2))
    check(w2, b2, *_reference_forward(x2, y2, lambda_param))

    # Case 3: batch == 1 -> sample axis split across 2 "parallel" partial Grams.
    x3 = jax.random.normal(ks[4], (1, 512, d), dtype=jnp.float32)
    y3 = jax.random.normal(ks[5], (1, 512, o), dtype=jnp.float32)
    w3, b3 = ridge_regressor_forward(x3, y3, lambda_param=lambda_param, tile_n=128)
    jax.block_until_ready((w3, b3))
    check(w3, b3, *_reference_forward(x3, y3, lambda_param))

    # Case 4: n_samples not a multiple of the tile -> masked trailing tile (no HBM pad).
    x4 = jax.random.normal(ks[6], (batch, 300, d), dtype=jnp.float32)
    y4 = jax.random.normal(ks[7], (batch, 300, o), dtype=jnp.float32)
    w4, b4 = ridge_regressor_forward(x4, y4, lambda_param=lambda_param, tile_n=128)
    jax.block_until_ready((w4, b4))
    check(w4, b4, *_reference_forward(x4, y4, lambda_param))

    print("KERNEL_OK")
</pallas_src>

<mosaic_0001>
module attributes {stable_mosaic.version = 11 : i64} {
  func.func @kernel(%arg0: i32, %arg1: i32, %arg2: i32, %arg3: memref<1x8x128xf32, #tpu.memory_space<vmem>>, %arg4: memref<1x4x128xf32, #tpu.memory_space<vmem>>, %arg5: memref<1x1x8x8xf32, #tpu.memory_space<vmem>>, %arg6: memref<1x1x8x4xf32, #tpu.memory_space<vmem>>, %arg7: memref<1x1x8x1xf32, #tpu.memory_space<vmem>>, %arg8: memref<1x1x4x1xf32, #tpu.memory_space<vmem>>) attributes {dimension_semantics = [#tpu.dimension_semantics<parallel>, #tpu.dimension_semantics<parallel>, #tpu.dimension_semantics<arbitrary>], iteration_bounds = array<i64: 2, 1, 2>, scalar_prefetch = 0 : i64, scratch_operands = 0 : i64, tpu.core_type = #tpu.core_type<tc>, window_params = [{transform_indices = @transform_0, window_bounds = array<i64: 1, 8, 128>}, {transform_indices = @transform_1, window_bounds = array<i64: 1, 4, 128>}, {transform_indices = @transform_2, window_bounds = array<i64: 1, 1, 8, 8>}, {transform_indices = @transform_3, window_bounds = array<i64: 1, 1, 8, 4>}, {transform_indices = @transform_4, window_bounds = array<i64: 1, 1, 8, 1>}, {transform_indices = @transform_5, window_bounds = array<i64: 1, 1, 4, 1>}]} {
    %c0_i32 = arith.constant 0 : i32
    %0 = arith.cmpi eq, %arg2, %c0_i32 : i32
    %1 = arith.extui %0 : i1 to i32
    %c0_i32_0 = arith.constant 0 : i32
    %2 = arith.cmpi ne, %1, %c0_i32_0 : i32
    scf.if %2 {
      %cst_41 = arith.constant 0.000000e+00 : f32
      %35 = vector.broadcast %cst_41 : f32 to vector<1x8x8xf32>
      %c0_42 = arith.constant 0 : index
      %c0_43 = arith.constant 0 : index
      %c0_44 = arith.constant 0 : index
      %c0_45 = arith.constant 0 : index
      %36 = vector.load %arg5[%c0_42, %c0_43, %c0_44, %c0_45] : memref<1x1x8x8xf32, #tpu.memory_space<vmem>>, vector<1x1x8x8xf32>
      %37 = vector.shape_cast %36 : vector<1x1x8x8xf32> to vector<1x8x8xf32>
      %38 = vector.shape_cast %35 : vector<1x8x8xf32> to vector<1x1x8x8xf32>
      tpu.vector_store %arg5[%c0_42, %c0_43, %c0_44, %c0_45], %38 {strides = array<i32>} : memref<1x1x8x8xf32, #tpu.memory_space<vmem>>, vector<1x1x8x8xf32>,
      %cst_46 = arith.constant 0.000000e+00 : f32
      %39 = vector.broadcast %cst_46 : f32 to vector<1x8x4xf32>
      %c0_47 = arith.constant 0 : index
      %c0_48 = arith.constant 0 : index
      %c0_49 = arith.constant 0 : index
      %c0_50 = arith.constant 0 : index
      %40 = vector.load %arg6[%c0_47, %c0_48, %c0_49, %c0_50] : memref<1x1x8x4xf32, #tpu.memory_space<vmem>>, vector<1x1x8x4xf32>
      %41 = vector.shape_cast %40 : vector<1x1x8x4xf32> to vector<1x8x4xf32>
      %42 = vector.shape_cast %39 : vector<1x8x4xf32> to vector<1x1x8x4xf32>
      tpu.vector_store %arg6[%c0_47, %c0_48, %c0_49, %c0_50], %42 {strides = array<i32>} : memref<1x1x8x4xf32, #tpu.memory_space<vmem>>, vector<1x1x8x4xf32>,
      %cst_51 = arith.constant 0.000000e+00 : f32
      %43 = vector.broadcast %cst_51 : f32 to vector<1x8x1xf32>
      %c0_52 = arith.constant 0 : index
      %c0_53 = arith.constant 0 : index
      %c0_54 = arith.constant 0 : index
      %c0_55 = arith.constant 0 : index
      %44 = vector.load %arg7[%c0_52, %c0_53, %c0_54, %c0_55] : memref<1x1x8x1xf32, #tpu.memory_space<vmem>>, vector<1x1x8x1xf32>
      %45 = vector.shape_cast %44 : vector<1x1x8x1xf32> to vector<1x8x1xf32>
      %46 = vector.shape_cast %43 : vector<1x8x1xf32> to vector<1x1x8x1xf32>
      tpu.vector_store %arg7[%c0_52, %c0_53, %c0_54, %c0_55], %46 {strides = array<i32>} : memref<1x1x8x1xf32, #tpu.memory_space<vmem>>, vector<1x1x8x1xf32>,
      %cst_56 = arith.constant 0.000000e+00 : f32
      %47 = vector.broadcast %cst_56 : f32 to vector<1x4x1xf32>
      %c0_57 = arith.constant 0 : index
      %c0_58 = arith.constant 0 : index
      %c0_59 = arith.constant 0 : index
      %c0_60 = arith.constant 0 : index
      %48 = vector.load %arg8[%c0_57, %c0_58, %c0_59, %c0_60] : memref<1x1x4x1xf32, #tpu.memory_space<vmem>>, vector<1x1x4x1xf32>
      %49 = vector.shape_cast %48 : vector<1x1x4x1xf32> to vector<1x4x1xf32>
      %50 = vector.shape_cast %47 : vector<1x4x1xf32> to vector<1x1x4x1xf32>
      tpu.vector_store %arg8[%c0_57, %c0_58, %c0_59, %c0_60], %50 {strides = array<i32>} : memref<1x1x4x1xf32, #tpu.memory_space<vmem>>, vector<1x1x4x1xf32>,
    } else {
    }
    %c0 = arith.constant 0 : index
    %c0_1 = arith.constant 0 : index
    %c0_2 = arith.constant 0 : index
    %3 = vector.load %arg3[%c0, %c0_1, %c0_2] : memref<1x8x128xf32, #tpu.memory_space<vmem>>, vector<1x8x128xf32>
    %c0_3 = arith.constant 0 : index
    %c0_4 = arith.constant 0 : index
    %c0_5 = arith.constant 0 : index
    %4 = vector.load %arg4[%c0_3, %c0_4, %c0_5] : memref<1x4x128xf32, #tpu.memory_space<vmem>>, vector<1x4x128xf32>
    %c0_6 = arith.constant 0 : index
    %c0_7 = arith.constant 0 : index
    %c0_8 = arith.constant 0 : index
    %c0_9 = arith.constant 0 : index
    %5 = vector.load %arg5[%c0_6, %c0_7, %c0_8, %c0_9] : memref<1x1x8x8xf32, #tpu.memory_space<vmem>>, vector<1x1x8x8xf32>
    %6 = vector.shape_cast %5 : vector<1x1x8x8xf32> to vector<1x8x8xf32>
    %cst = arith.constant dense<0.000000e+00> : vector<1x8x8xf32>
    %7 = tpu.matmul %3, %3, %cst {dimension_numbers = #tpu.dot_dimension_numbers<[2], [2], [1], [1], [0, 0, 0, 1, 1, 1], [0], [0]>, precision = #tpu.contract_precision<fp32>} : vector<1x8x128xf32>, vector<1x8x128xf32>, vector<1x8x8xf32> -> vector<1x8x8xf32>
    %8 = arith.addf %6, %7 : vector<1x8x8xf32>
    %c0_10 = arith.constant 0 : index
    %c0_11 = arith.constant 0 : index
    %c0_12 = arith.constant 0 : index
    %c0_13 = arith.constant 0 : index
    %9 = vector.load %arg5[%c0_10, %c0_11, %c0_12, %c0_13] : memref<1x1x8x8xf32, #tpu.memory_space<vmem>>, vector<1x1x8x8xf32>
    %10 = vector.shape_cast %9 : vector<1x1x8x8xf32> to vector<1x8x8xf32>
    %11 = vector.shape_cast %8 : vector<1x8x8xf32> to vector<1x1x8x8xf32>
    tpu.vector_store %arg5[%c0_10, %c0_11, %c0_12, %c0_13], %11 {strides = array<i32>} : memref<1x1x8x8xf32, #tpu.memory_space<vmem>>, vector<1x1x8x8xf32>,
    %c0_14 = arith.constant 0 : index
    %c0_15 = arith.constant 0 : index
    %c0_16 = arith.constant 0 : index
    %c0_17 = arith.constant 0 : index
    %12 = vector.load %arg6[%c0_14, %c0_15, %c0_16, %c0_17] : memref<1x1x8x4xf32, #tpu.memory_space<vmem>>, vector<1x1x8x4xf32>
    %13 = vector.shape_cast %12 : vector<1x1x8x4xf32> to vector<1x8x4xf32>
    %cst_18 = arith.constant dense<0.000000e+00> : vector<1x8x4xf32>
    %14 = tpu.matmul %3, %4, %cst_18 {dimension_numbers = #tpu.dot_dimension_numbers<[2], [2], [1], [1], [0, 0, 0, 1, 1, 1], [0], [0]>, precision = #tpu.contract_precision<fp32>} : vector<1x8x128xf32>, vector<1x4x128xf32>, vector<1x8x4xf32> -> vector<1x8x4xf32>
    %15 = arith.addf %13, %14 : vector<1x8x4xf32>
    %c0_19 = arith.constant 0 : index
    %c0_20 = arith.constant 0 : index
    %c0_21 = arith.constant 0 : index
    %c0_22 = arith.constant 0 : index
    %16 = vector.load %arg6[%c0_19, %c0_20, %c0_21, %c0_22] : memref<1x1x8x4xf32, #tpu.memory_space<vmem>>, vector<1x1x8x4xf32>
    %17 = vector.shape_cast %16 : vector<1x1x8x4xf32> to vector<1x8x4xf32>
    %18 = vector.shape_cast %15 : vector<1x8x4xf32> to vector<1x1x8x4xf32>
    tpu.vector_store %arg6[%c0_19, %c0_20, %c0_21, %c0_22], %18 {strides = array<i32>} : memref<1x1x8x4xf32, #tpu.memory_space<vmem>>, vector<1x1x8x4xf32>,
    %c0_23 = arith.constant 0 : index
    %c0_24 = arith.constant 0 : index
    %c0_25 = arith.constant 0 : index
    %c0_26 = arith.constant 0 : index
    %19 = vector.load %arg7[%c0_23, %c0_24, %c0_25, %c0_26] : memref<1x1x8x1xf32, #tpu.memory_space<vmem>>, vector<1x1x8x1xf32>
    %20 = vector.shape_cast %19 : vector<1x1x8x1xf32> to vector<1x8x1xf32>
    %cst_27 = arith.constant dense<0.000000e+00> : vector<1x8xf32>
    %21 = vector.multi_reduction <add>, %3, %cst_27 [2] : vector<1x8x128xf32> to vector<1x8xf32>
    %22 = vector.shape_cast %21 : vector<1x8xf32> to vector<1x8x1xf32>
    %23 = arith.addf %20, %22 : vector<1x8x1xf32>
    %c0_28 = arith.constant 0 : index
    %c0_29 = arith.constant 0 : index
    %c0_30 = arith.constant 0 : index
    %c0_31 = arith.constant 0 : index
    %24 = vector.load %arg7[%c0_28, %c0_29, %c0_30, %c0_31] : memref<1x1x8x1xf32, #tpu.memory_space<vmem>>, vector<1x1x8x1xf32>
    %25 = vector.shape_cast %24 : vector<1x1x8x1xf32> to vector<1x8x1xf32>
    %26 = vector.shape_cast %23 : vector<1x8x1xf32> to vector<1x1x8x1xf32>
    tpu.vector_store %arg7[%c0_28, %c0_29, %c0_30, %c0_31], %26 {strides = array<i32>} : memref<1x1x8x1xf32, #tpu.memory_space<vmem>>, vector<1x1x8x1xf32>,
    %c0_32 = arith.constant 0 : index
    %c0_33 = arith.constant 0 : index
    %c0_34 = arith.constant 0 : index
    %c0_35 = arith.constant 0 : index
    %27 = vector.load %arg8[%c0_32, %c0_33, %c0_34, %c0_35] : memref<1x1x4x1xf32, #tpu.memory_space<vmem>>, vector<1x1x4x1xf32>
    %28 = vector.shape_cast %27 : vector<1x1x4x1xf32> to vector<1x4x1xf32>
    %cst_36 = arith.constant dense<0.000000e+00> : vector<1x4xf32>
    %29 = vector.multi_reduction <add>, %4, %cst_36 [2] : vector<1x4x128xf32> to vector<1x4xf32>
    %30 = vector.shape_cast %29 : vector<1x4xf32> to vector<1x4x1xf32>
    %31 = arith.addf %28, %30 : vector<1x4x1xf32>
    %c0_37 = arith.constant 0 : index
    %c0_38 = arith.constant 0 : index
    %c0_39 = arith.constant 0 : index
    %c0_40 = arith.constant 0 : index
    %32 = vector.load %arg8[%c0_37, %c0_38, %c0_39, %c0_40] : memref<1x1x4x1xf32, #tpu.memory_space<vmem>>, vector<1x1x4x1xf32>
    %33 = vector.shape_cast %32 : vector<1x1x4x1xf32> to vector<1x4x1xf32>
    %34 = vector.shape_cast %31 : vector<1x4x1xf32> to vector<1x1x4x1xf32>
    tpu.vector_store %arg8[%c0_37, %c0_38, %c0_39, %c0_40], %34 {strides = array<i32>} : memref<1x1x4x1xf32, #tpu.memory_space<vmem>>, vector<1x1x4x1xf32>,
    return
  }
  func.func @transform_0(%arg0: i32, %arg1: i32, %arg2: i32) -> (i32, i32, i32) {
    %c2_i32 = arith.constant 2 : i32
    %0 = arith.muli %arg1, %c2_i32 : i32
    %1 = arith.addi %0, %arg2 : i32
    %c0_i32 = arith.constant 0 : i32
    %c0_i32_0 = arith.constant 0 : i32
    return %arg0, %c0_i32, %1 : i32, i32, i32
  }
  func.func @transform_1(%arg0: i32, %arg1: i32, %arg2: i32) -> (i32, i32, i32) {
    %c2_i32 = arith.constant 2 : i32
    %0 = arith.muli %arg1, %c2_i32 : i32
    %1 = arith.addi %0, %arg2 : i32
    %c0_i32 = arith.constant 0 : i32
    %c0_i32_0 = arith.constant 0 : i32
    return %arg0, %c0_i32, %1 : i32, i32, i32
  }
  func.func @transform_2(%arg0: i32, %arg1: i32, %arg2: i32) -> (i32, i32, i32, i32) {
    %c0_i32 = arith.constant 0 : i32
    %c0_i32_0 = arith.constant 0 : i32
    %c0_i32_1 = arith.constant 0 : i32
    return %arg1, %arg0, %c0_i32, %c0_i32_0 : i32, i32, i32, i32
  }
  func.func @transform_3(%arg0: i32, %arg1: i32, %arg2: i32) -> (i32, i32, i32, i32) {
    %c0_i32 = arith.constant 0 : i32
    %c0_i32_0 = arith.constant 0 : i32
    %c0_i32_1 = arith.constant 0 : i32
    return %arg1, %arg0, %c0_i32, %c0_i32_0 : i32, i32, i32, i32
  }
  func.func @transform_4(%arg0: i32, %arg1: i32, %arg2: i32) -> (i32, i32, i32, i32) {
    %c0_i32 = arith.constant 0 : i32
    %c0_i32_0 = arith.constant 0 : i32
    %c0_i32_1 = arith.constant 0 : i32
    return %arg1, %arg0, %c0_i32, %c0_i32_0 : i32, i32, i32, i32
  }
  func.func @transform_5(%arg0: i32, %arg1: i32, %arg2: i32) -> (i32, i32, i32, i32) {
    %c0_i32 = arith.constant 0 : i32
    %c0_i32_0 = arith.constant 0 : i32
    %c0_i32_1 = arith.constant 0 : i32
    return %arg1, %arg0, %c0_i32, %c0_i32_0 : i32, i32, i32, i32
  }
}

</mosaic_0001>

<llo_original>
// kernel: tpu_custom_call.1
$region0: #{tpu_custom_call.1}
  #allocation0 [shape = 'u32[]', space=smem, size = 0x4, offset = 0x4, fixed_abs, tag = 'smem constant byte address 0x4 - core index']
  #allocation1 [shape = 'u32[144,128]{1,0:T(1,128)}', space=vmem, size = 0x12000, scoped, tag = 'internal scratch']
  %s0 = inlined_call_operand.hbm [shape: f32[2,8,256], index: 0, kind: input, shape index: {}]
  %s1 = inlined_call_operand.hbm [shape: f32[2,4,256], index: 1, kind: input, shape index: {}]
  %s2 = inlined_call_operand.hbm [shape: f32[1,2,8,8], index: 2, kind: output, shape index: {0}]
  %s3 = inlined_call_operand.vmem [shape: f32[1,2,8,4], index: 3, kind: output, shape index: {1}]
  %s4 = inlined_call_operand.vmem [shape: f32[1,2,8,1], index: 4, kind: output, shape index: {2}]
  %s5 = inlined_call_operand.vmem [shape: f32[1,2,4,1], index: 5, kind: output, shape index: {3}]
  %6 = xla_tuple %s2, %s3, %s4, %s5
  %s7 = sld [smem:[#allocation0]]
  $region77: #{tpu_custom_call.1} parent=0
    _
  %s9 = ssub.s32 1, %s7
  %s10 = scalar_select 0, %s9, %s7
  $region1: #{tpu_custom_call.1} parent=0
    #allocation2 [shape = 'u8[8192]{0}', space=vmem, size = 0x2000, scoped, tag = 'input window, operand 0']
    #allocation3 [shape = 's32[2]{0}', space=sflag, size = 0x8, scoped, tag = 'scoped memory for tpu_custom_call.1']
    #allocation4 [shape = 's32[2]{0}', space=sflag, size = 0x8, scoped, tag = 'scoped memory for tpu_custom_call.1']
    #allocation5 [shape = 'u8[4096]{0}', space=vmem, size = 0x1000, scoped, tag = 'input window, operand 1']
    #allocation6 [shape = 's32[2]{0}', space=sflag, size = 0x8, scoped, tag = 'scoped memory for tpu_custom_call.1']
    #allocation7 [shape = 'u8[8192]{0}', space=vmem, size = 0x2000, scoped, tag = 'output window, operand 0']
    %11 = vsyncpa [#allocation3], 0
    %s12 = scalar_lea.sflag [#allocation3], 1
    %13 = vsyncpa %s12, 0
    %14 = vsyncpa [#allocation6], 0
    %s15 = scalar_lea.sflag [#allocation6], 1
    %16 = vsyncpa %s15, 0
    %17 = vsyncpa [#allocation4], 0
    %s18 = scalar_lea.sflag [#allocation4], 1
    %19 = vsyncpa %s18, 0
    loop: start=0, step=1, limit=6
    $region2: #{tpu_custom_call.1} parent=1 // loop_pre_header
      _
    $region3: #{tpu_custom_call.1} parent=1 // loop_header
      %s21 = sphi 0, %s25
      %p22 = scmp.ge.s32.totalorder %s21, 6
      %s28 = sphi 0, %s47
      %s29 = sphi 0, %s43
      %s30 = sphi 0, %s39
      %s31 = sphi 0, %s28
      %s32 = sphi 0, %s29
      %s33 = sphi 0, %s30
      %s34 = sphi 0, %s31
      %s35 = sphi 0, %s32
      %s36 = sphi 0, %s33
      %s56 = sphi 0, %s58
      %s59 = sphi 0, %s56
      %s60 = sphi 0, %s59
      %s76 = sphi 0, %s60
      %s88 = sphi 0, %s90
      %s91 = sphi 0, %s88
      %s92 = sphi 0, %s91
      %s108 = sphi 0, %s92
      %s116 = sphi 0, %s118
      %s119 = sphi 0, %s116
      %s120 = sphi 0, %s119
      %s136 = sphi 0, %s120
      %s144 = sphi 0, %s146
      %s147 = sphi 0, %s144
      %s148 = sphi 0, %s147
      %s164 = sphi 0, %s148
      %s172 = sphi 0, %s174
      %s175 = sphi 0, %s172
      %s176 = sphi 0, %s175
      %s192 = sphi 0, %s176
      %s200 = sphi 0, %s202
      %s203 = sphi 0, %s200
      %s204 = sphi 0, %s203
      %s220 = sphi 0, %s204
    $region4: #{tpu_custom_call.1} parent=1 // loop_header_branch
      %24 = sbr.rel (%p22) target = $region8
    $region5: #{tpu_custom_call.1} parent=1 // loop_body
      %s26 = ssub.s32 %s21, 1
      %s27 = ssub.s32 %s21, 2
      %s37 = sadd.s32 1, %s30
      %p38 = scmp.ge.s32.totalorder %s37, 2
      %s39 = scalar_select %p38, 0, %s37
      %s40 = sadd.s32 1, %s29
      %s41 = scalar_select %p38, %s40, %s29
      %p42 = scmp.ge.s32.totalorder %s41, 1
      %s43 = scalar_select %p42, 0, %s41
      %s44 = sadd.s32 1, %s28
      %s45 = scalar_select %p42, %s44, %s28
      %p46 = scmp.ge.s32.totalorder %s45, 2
      %s47 = scalar_select %p46, 0, %s45
      %s48 = smul.u32 %s29, 2
      %s49 = sadd.s32 %s48, %s30
      %s50 = smul.u32 %s43, 2
      %s51 = sadd.s32 %s50, %s39
      %s52 = ssub.s32 %s28, %s47
      %s53 = ssub.s32 %s49, %s51
      %s54 = sor.u32 %s52, %s53
      %p55 = scmp.eq.s32.totalorder %s54, 0
      %s57 = sadd.s32 %s56, 1
      %s58 = scalar_select %p55, %s56, %s57
      %p61 = pneg %p55
      %p62 = scmp.eq.s32.totalorder %s21, 3
      %p63 = por %p61, %p62
      %p64 = scmp.ne.s32.totalorder %s56, %s59
      %p65 = scmp.eq.s32.totalorder %s21, 0
      %p66 = por %p64, %p65
      %p67 = scmp.ne.s32.totalorder %s56, %s59
      %p68 = scmp.eq.s32.totalorder %s26, 3
      %p69 = por %p67, %p68
      %p70 = scmp.ne.s32.totalorder %s59, %s60
      %p71 = scmp.eq.s32.totalorder %s26, 0
      %p72 = por %p70, %p71
      %p73 = scmp.ne.s32.totalorder %s59, %s60
      %p74 = scmp.eq.s32.totalorder %s27, 3
      %p75 = por %p73, %p74
      %p77 = scmp.ne.s32.totalorder %s60, %s76
      %p78 = scmp.eq.s32.totalorder %s27, 0
      %p79 = por %p77, %p78
      %s80 = smul.u32 %s29, 2
      %s81 = sadd.s32 %s80, %s30
      %s82 = smul.u32 %s43, 2
      %s83 = sadd.s32 %s82, %s39
      %s84 = ssub.s32 %s28, %s47
      %s85 = ssub.s32 %s81, %s83
      %s86 = sor.u32 %s84, %s85
      %p87 = scmp.eq.s32.totalorder %s86, 0
      %s89 = sadd.s32 %s88, 1
      %s90 = scalar_select %p87, %s88, %s89
      %p93 = pneg %p87
      %p94 = scmp.eq.s32.totalorder %s21, 3
      %p95 = por %p93, %p94
      %p96 = scmp.ne.s32.totalorder %s88, %s91
      %p97 = scmp.eq.s32.totalorder %s21, 0
      %p98 = por %p96, %p97
      %p99 = scmp.ne.s32.totalorder %s88, %s91
      %p100 = scmp.eq.s32.totalorder %s26, 3
      %p101 = por %p99, %p100
      %p102 = scmp.ne.s32.totalorder %s91, %s92
      %p103 = scmp.eq.s32.totalorder %s26, 0
      %p104 = por %p102, %p103
      %p105 = scmp.ne.s32.totalorder %s91, %s92
      %p106 = scmp.eq.s32.totalorder %s27, 3
      %p107 = por %p105, %p106
      %p109 = scmp.ne.s32.totalorder %s92, %s108
      %p110 = scmp.eq.s32.totalorder %s27, 0
      %p111 = por %p109, %p110
      %s112 = ssub.s32 %s29, %s43
      %s113 = ssub.s32 %s28, %s47
      %s114 = sor.u32 %s112, %s113
      %p115 = scmp.eq.s32.totalorder %s114, 0
      %s117 = sadd.s32 %s116, 1
      %s118 = scalar_select %p115, %s116, %s117
      %p121 = pneg %p115
      %p122 = scmp.eq.s32.totalorder %s21, 3
      %p123 = por %p121, %p122
      %p124 = scmp.ne.s32.totalorder %s116, %s119
      %p125 = scmp.eq.s32.totalorder %s21, 0
      %p126 = por %p124, %p125
      %p127 = scmp.ne.s32.totalorder %s116, %s119
      %p128 = scmp.eq.s32.totalorder %s26, 3
      %p129 = por %p127, %p128
      %p130 = scmp.ne.s32.totalorder %s119, %s120
      %p131 = scmp.eq.s32.totalorder %s26, 0
      %p132 = por %p130, %p131
      %p133 = scmp.ne.s32.totalorder %s119, %s120
      %p134 = scmp.eq.s32.totalorder %s27, 3
      %p135 = por %p133, %p134
      %p137 = scmp.ne.s32.totalorder %s120, %s136
      %p138 = scmp.eq.s32.totalorder %s27, 0
      %p139 = por %p137, %p138
      %s140 = ssub.s32 %s29, %s43
      %s141 = ssub.s32 %s28, %s47
      %s142 = sor.u32 %s140, %s141
      %p143 = scmp.eq.s32.totalorder %s142, 0
      %s145 = sadd.s32 %s144, 1
      %s146 = scalar_select %p143, %s144, %s145
      %p149 = pneg %p143
      %p150 = scmp.eq.s32.totalorder %s21, 3
      %p151 = por %p149, %p150
      %p152 = scmp.ne.s32.totalorder %s144, %s147
      %p153 = scmp.eq.s32.totalorder %s21, 0
      %p154 = por %p152, %p153
      %p155 = scmp.ne.s32.totalorder %s144, %s147
      %p156 = scmp.eq.s32.totalorder %s26, 3
      %p157 = por %p155, %p156
      %p158 = scmp.ne.s32.totalorder %s147, %s148
      %p159 = scmp.eq.s32.totalorder %s26, 0
      %p160 = por %p158, %p159
      %p161 = scmp.ne.s32.totalorder %s147, %s148
      %p162 = scmp.eq.s32.totalorder %s27, 3
      %p163 = por %p161, %p162
      %p165 = scmp.ne.s32.totalorder %s148, %s164
      %p166 = scmp.eq.s32.totalorder %s27, 0
      %p167 = por %p165, %p166
      %s168 = ssub.s32 %s29, %s43
      %s169 = ssub.s32 %s28, %s47
      %s170 = sor.u32 %s168, %s169
      %p171 = scmp.eq.s32.totalorder %s170, 0
      %s173 = sadd.s32 %s172, 1
      %s174 = scalar_select %p171, %s172, %s173
      %p177 = pneg %p171
      %p178 = scmp.eq.s32.totalorder %s21, 3
      %p179 = por %p177, %p178
      %p180 = scmp.ne.s32.totalorder %s172, %s175
      %p181 = scmp.eq.s32.totalorder %s21, 0
      %p182 = por %p180, %p181
      %p183 = scmp.ne.s32.totalorder %s172, %s175
      %p184 = scmp.eq.s32.totalorder %s26, 3
      %p185 = por %p183, %p184
      %p186 = scmp.ne.s32.totalorder %s175, %s176
      %p187 = scmp.eq.s32.totalorder %s26, 0
      %p188 = por %p186, %p187
      %p189 = scmp.ne.s32.totalorder %s175, %s176
      %p190 = scmp.eq.s32.totalorder %s27, 3
      %p191 = por %p189, %p190
      %p193 = scmp.ne.s32.totalorder %s176, %s192
      %p194 = scmp.eq.s32.totalorder %s27, 0
      %p195 = por %p193, %p194
      %s196 = ssub.s32 %s29, %s43
      %s197 = ssub.s32 %s28, %s47
      %s198 = sor.u32 %s196, %s197
      %p199 = scmp.eq.s32.totalorder %s198, 0
      %s201 = sadd.s32 %s200, 1
      %s202 = scalar_select %p199, %s200, %s201
      %p205 = pneg %p199
      %p206 = scmp.eq.s32.totalorder %s21, 3
      %p207 = por %p205, %p206
      %p208 = scmp.ne.s32.totalorder %s200, %s203
      %p209 = scmp.eq.s32.totalorder %s21, 0
      %p210 = por %p208, %p209
      %p211 = scmp.ne.s32.totalorder %s200, %s203
      %p212 = scmp.eq.s32.totalorder %s26, 3
      %p213 = por %p211, %p212
      %p214 = scmp.ne.s32.totalorder %s203, %s204
      %p215 = scmp.eq.s32.totalorder %s26, 0
      %p216 = por %p214, %p215
      %p217 = scmp.ne.s32.totalorder %s203, %s204
      %p218 = scmp.eq.s32.totalorder %s27, 3
      %p219 = por %p217, %p218
      %p221 = scmp.ne.s32.totalorder %s204, %s220
      %p222 = scmp.eq.s32.totalorder %s27, 0
      %p223 = por %p221, %p222
      %p224 = scmp.le.s32.totalorder 1, %s21
      %p225 = scmp.lt.s32.totalorder %s21, 5
      %p226 = pnand %p224, %p225
      %p227 = pneg %p226
      // Predicated region
      $region9: #{tpu_custom_call.1} parent=5 // pred_check
        _
      $region10: #{tpu_custom_call.1} parent=5 // pred_check_branch
        %229 = sbr.rel (%p226) target = $region12
      $region11: #{tpu_custom_call.1} parent=5 // pred_region
        %s230 = ssub.s32 %s21, 1
      $region12: #{tpu_custom_call.1} parent=5 // pred_fallthru
        _
      %p231 = scmp.lt.s32.totalorder %s21, 4
      // Predicated region
      $region13: #{tpu_custom_call.1} parent=5 // pred_check
        %p232 = pneg %p231
      $region14: #{tpu_custom_call.1} parent=5 // pred_check_branch
        %234 = sbr.rel (%p232) target = $region16
      $region15: #{tpu_custom_call.1} parent=5 // pred_region
        // Predicated region
        $region17: #{tpu_custom_call.1} parent=15 // pred_check
          %p235 = pneg %p66
        $region18: #{tpu_custom_call.1} parent=15 // pred_check_branch
          %237 = sbr.rel (%p235) target = $region20
        $region19: #{tpu_custom_call.1} parent=15 // pred_region
          %s238 = sand.u32 %s56, 1
          %s239 = scalar_lea.sflag [#allocation3], %s238
          %s240 = sand.u32 %s56, 1
          %s241 = smul.addr %s240, 8
          %s242 = scalar_lea.vmem [#allocation2], %s241
          %s243 = smul.u32 %s29, 2
          %s244 = sadd.s32 %s243, %s30
          %s246 = ssub.s32 128, 128
          %247 = vsyncadd %s239, %s246
          %s248 = smul.addr %s28, 2
          %s249 = sadd.s32 %s244, %s248
          %s250 = smul.addr %s249, 128
          %s251 = scalar_lea.hbm %s0, %s250
          %s253 = sshll.u32 %s242, 4
          %s254 = int_to_ptr.vmem [resolvable:$true] %s253
          %256 = dma.hbm_to_vmem [thread:$0]  %s251, 128, %s254, %s239
        $region20: #{tpu_custom_call.1} parent=15 // pred_fallthru
          _
        // Predicated region
        $region21: #{tpu_custom_call.1} parent=15 // pred_check
          %p257 = pneg %p98
        $region22: #{tpu_custom_call.1} parent=15 // pred_check_branch
          %259 = sbr.rel (%p257) target = $region24
        $region23: #{tpu_custom_call.1} parent=15 // pred_region
          %s260 = sand.u32 %s88, 1
          %s261 = scalar_lea.sflag [#allocation6], %s260
          %s262 = sand.u32 %s88, 1
          %s263 = smul.addr %s262, 4
          %s264 = scalar_lea.vmem [#allocation5], %s263
          %s265 = smul.u32 %s29, 2
          %s266 = sadd.s32 %s265, %s30
          %s268 = ssub.s32 64, 64
          %269 = vsyncadd %s261, %s268
          %s270 = smul.addr %s28, 2
          %s271 = sadd.s32 %s266, %s270
          %s272 = smul.addr %s271, 64
          %s273 = scalar_lea.hbm %s1, %s272
          %s275 = sshll.u32 %s264, 4
          %s276 = int_to_ptr.vmem [resolvable:$true] %s275
          %278 = dma.hbm_to_vmem [thread:$0]  %s273, 64, %s276, %s261
        $region24: #{tpu_custom_call.1} parent=15 // pred_fallthru
          _
      $region16: #{tpu_custom_call.1} parent=5 // pred_fallthru
        _
      %p279 = scmp.le.s32.totalorder 1, %s21
      %p280 = scmp.lt.s32.totalorder %s21, 5
      %p281 = pnand %p279, %p280
      %p282 = pneg %p281
      // Predicated region
      $region25: #{tpu_custom_call.1} parent=5 // pred_check
        _
      $region26: #{tpu_custom_call.1} parent=5 // pred_check_branch
        %284 = sbr.rel (%p281) target = $region28
      $region27: #{tpu_custom_call.1} parent=5 // pred_region
        %s285 = ssub.s32 %s21, 1
        %s286 = sand.u32 %s59, 1
        %s287 = scalar_lea.sflag [#allocation3], %s286
        %s288 = sand.u32 %s59, 1
        %s289 = smul.addr %s288, 8
        %s290 = scalar_lea.vmem [#allocation2], %s289
        // Predicated region
        $region29: #{tpu_custom_call.1} parent=27 // pred_check
          %p291 = pneg %p72
        $region30: #{tpu_custom_call.1} parent=27 // pred_check_branch
          %293 = sbr.rel (%p291) target = $region32
        $region31: #{tpu_custom_call.1} parent=27 // pred_region
          %294 = dma.done %s287, 128
        $region32: #{tpu_custom_call.1} parent=27 // pred_fallthru
          _
        %s295 = sand.u32 %s91, 1
        %s296 = scalar_lea.sflag [#allocation6], %s295
        %s297 = sand.u32 %s91, 1
        %s298 = smul.addr %s297, 4
        %s299 = scalar_lea.vmem [#allocation5], %s298
        // Predicated region
        $region33: #{tpu_custom_call.1} parent=27 // pred_check
          %p300 = pneg %p104
        $region34: #{tpu_custom_call.1} parent=27 // pred_check_branch
          %302 = sbr.rel (%p300) target = $region36
        $region35: #{tpu_custom_call.1} parent=27 // pred_region
          %303 = dma.done %s296, 64
        $region36: #{tpu_custom_call.1} parent=27 // pred_fallthru
          _
        %s304 = sand.u32 %s59, 1
        %s305 = scalar_lea.sflag [#allocation3], %s304
        %s306 = sand.u32 %s59, 1
        %s307 = smul.addr %s306, 8
        %s308 = scalar_lea.vmem [#allocation2], %s307
        %p309 = pneg %p72
        %p310 = pneg %p69
        %s311 = sand.u32 %s91, 1
        %s312 = scalar_lea.sflag [#allocation6], %s311
        %s313 = sand.u32 %s91, 1
        %s314 = smul.addr %s313, 4
        %s315 = scalar_lea.vmem [#allocation5], %s314
        %p316 = pneg %p104
        %p317 = pneg %p101
        %p318 = pneg %p132
        %p319 = pneg %p129
        %s320 = sand.u32 %s119, 1
        %s321 = scalar_lea.sflag [#allocation4], %s320
        %s322 = sand.u32 %s119, 1
        %s323 = smul.addr %s322, 8
        %s324 = scalar_lea.vmem [#allocation7], %s323
        %p325 = pneg %p160
        %p326 = pneg %p157
        %p327 = scmp.lt.s32.totalorder %s32, 0
        %s328 = scalar_select %p327, %s32, 0
        %p329 = scmp.lt.s32.totalorder %s31, 1
        %s330 = scalar_select %p329, %s31, 1
        %s331 = smul.addr %s328, 2
        %s332 = sadd.s32 %s330, %s331
        %s333 = smul.addr %s332, 8
        %s334 = scalar_lea.vmem %s3, %s333
        %p335 = pneg %p188
        %p336 = pneg %p185
        %p337 = scmp.lt.s32.totalorder %s32, 0
        %s338 = scalar_select %p337, %s32, 0
        %p339 = scmp.lt.s32.totalorder %s31, 1
        %s340 = scalar_select %p339, %s31, 1
        %s341 = smul.addr %s338, 2
        %s342 = sadd.s32 %s340, %s341
        %s343 = smul.addr %s342, 8
        %s344 = scalar_lea.vmem %s4, %s343
        %p345 = pneg %p216
        %p346 = pneg %p213
        %p347 = scmp.lt.s32.totalorder %s32, 0
        %s348 = scalar_select %p347, %s32, 0
        %p349 = scmp.lt.s32.totalorder %s31, 1
        %s350 = scalar_select %p349, %s31, 1
        %s351 = smul.addr %s348, 2
        %s352 = sadd.s32 %s350, %s351
        %s353 = smul.addr %s352, 4
        %s354 = scalar_lea.vmem %s5, %s353
        %s355 = smul.u32 %s32, 2
        %s356 = sadd.s32 %s355, %s33
        %s357 = smul.u32 %s32, 2
        %s358 = sadd.s32 %s357, %s33
        %p359 = scmp.lt.s32.totalorder %s32, 0
        %s360 = scalar_select %p359, %s32, 0
        %p361 = scmp.lt.s32.totalorder %s31, 1
        %s362 = scalar_select %p361, %s31, 1
        %s363 = smul.addr %s360, 2
        %s364 = sadd.s32 %s362, %s363
        %s365 = smul.addr %s364, 8
        %s366 = scalar_lea.vmem %s3, %s365
        %p367 = scmp.lt.s32.totalorder %s32, 0
        %s368 = scalar_select %p367, %s32, 0
        %p369 = scmp.lt.s32.totalorder %s31, 1
        %s370 = scalar_select %p369, %s31, 1
        %s371 = smul.addr %s368, 2
        %s372 = sadd.s32 %s370, %s371
        %s373 = smul.addr %s372, 8
        %s374 = scalar_lea.vmem %s4, %s373
        %p375 = scmp.lt.s32.totalorder %s32, 0
        %s376 = scalar_select %p375, %s32, 0
        %p377 = scmp.lt.s32.totalorder %s31, 1
        %s378 = scalar_select %p377, %s31, 1
        %s379 = smul.addr %s376, 2
        %s380 = sadd.s32 %s378, %s379
        %s381 = smul.addr %s380, 4
        %s382 = scalar_lea.vmem %s5, %s381
        %p383 = scmp.eq.s32.totalorder %s33, 0
        // Predicated region
        $region37: #{tpu_custom_call.1} parent=27 // pred_check
          %p384 = pneg %p383
        $region38: #{tpu_custom_call.1} parent=27 // pred_check_branch
          %386 = sbr.rel (%p384) target = $region40
        $region39: #{tpu_custom_call.1} parent=27 // pred_region
          %vm387 = vcmask 64512
          %388 = vst.msk [vmem:[%s324] sm:$0xff] %vm387, 0.0
          %vm389 = vcmask 31744
          %390 = vst.msk [vmem:[%s366] sm:$0xff] %vm389, 0.0
          %vm391 = vcmask 7168
          %392 = vst.msk [vmem:[%s374] sm:$0xff] %vm391, 0.0
          %vm393 = vcmask 3072
          %394 = vst.msk [vmem:[%s382] sm:$0xf] %vm393, 0.0
        $region40: #{tpu_custom_call.1} parent=27 // pred_fallthru
          _
        %v395 = vld [vmem:[%s290] sm:$0xff]
        %v396 = vld [vmem:[%s299] sm:$0xf]
        %v397 = vld [vmem:[%s324] sm:$0xff]
        %398 = vmatprep.subr.mxu0 0.0
        %399 = vmatpush1.xpose.msra.mxu0 0.0
        %400 = vmatprep.subr.mxu0 0.0
        %401 = vmatpush1.xpose.msra.mxu0 0.0
        %402 = vmatprep.subr.mxu0 0.0
        %403 = vmatpush1.xpose.msra.mxu0 0.0
        %404 = vmatprep.subr.mxu0 0.0
        %405 = vmatpush1.xpose.msra.mxu0 0.0
        %406 = vmatprep.subr.mxu0 0.0
        %407 = vmatpush1.xpose.msra.mxu0 0.0
        %408 = vmatprep.subr.mxu0 0.0
        %409 = vmatpush1.xpose.msra.mxu0 0.0
        %410 = vmatprep.subr.mxu0 0.0
        %411 = vmatpush1.xpose.msra.mxu0 0.0
        %412 = vmatprep.subr.mxu0 0.0
        %413 = vmatpush1.xpose.msra.mxu0 0.0
        %414 = vmatprep.subr.mxu0 0.0
        %415 = vmatpush1.xpose.msra.mxu0 0.0
        %416 = vmatprep.subr.mxu0 0.0
        %417 = vmatpush1.xpose.msra.mxu0 0.0
        %418 = vmatprep.subr.mxu0 0.0
        %419 = vmatpush1.xpose.msra.mxu0 0.0
        %420 = vmatprep.subr.mxu0 0.0
        %421 = vmatpush1.xpose.msra.mxu0 0.0
        %422 = vmatprep.subr.mxu0 0.0
        %423 = vmatpush1.xpose.msra.mxu0 0.0
        %424 = vmatprep.subr.mxu0 0.0
        %425 = vmatpush1.xpose.msra.mxu0 0.0
        %426 = vmatprep.subr.mxu0 0.0
        %427 = vmatpush1.xpose.msra.mxu0 0.0
        %428 = vmatprep.subr.mxu0 0.0
        %v429 = vand.u32 %v395, 4294901760
        %430 = vmatpush1.xpose.msra.mxu0 %v429
        %431 = vmatprep.subr.mxu0 0.0
        %432 = vmatpush2.xpose.msra.mxu0 0.0
        %433 = vmatprep.subr.mxu0 0.0
        %434 = vmatpush2.xpose.msra.mxu0 0.0
        %435 = vmatprep.subr.mxu0 0.0
        %436 = vmatpush2.xpose.msra.mxu0 0.0
        %437 = vmatprep.subr.mxu0 0.0
        %438 = vmatpush2.xpose.msra.mxu0 0.0
        %439 = vmatprep.subr.mxu0 0.0
        %440 = vmatpush2.xpose.msra.mxu0 0.0
        %441 = vmatprep.subr.mxu0 0.0
        %442 = vmatpush2.xpose.msra.mxu0 0.0
        %443 = vmatprep.subr.mxu0 0.0
        %444 = vmatpush2.xpose.msra.mxu0 0.0
        %445 = vmatprep.subr.mxu0 0.0
        %446 = vmatpush2.xpose.msra.mxu0 0.0
        %447 = vmatprep.subr.mxu0 0.0
        %448 = vmatpush2.xpose.msra.mxu0 0.0
        %449 = vmatprep.subr.mxu0 0.0
        %450 = vmatpush2.xpose.msra.mxu0 0.0
        %451 = vmatprep.subr.mxu0 0.0
        %452 = vmatpush2.xpose.msra.mxu0 0.0
        %453 = vmatprep.subr.mxu0 0.0
        %454 = vmatpush2.xpose.msra.mxu0 0.0
        %455 = vmatprep.subr.mxu0 0.0
        %456 = vmatpush2.xpose.msra.mxu0 0.0
        %457 = vmatprep.subr.mxu0 0.0
        %458 = vmatpush2.xpose.msra.mxu0 0.0
        %459 = vmatprep.subr.mxu0 0.0
        %460 = vmatpush2.xpose.msra.mxu0 0.0
        %461 = vmatprep.subr.mxu0 0.0
        %462 = vmatpush2.xpose.msra.mxu0 0.0
        %463 = vmatprep.mubr.f32.mxu0 0.0
        %v464 = vand.u32 %v395, 4294901760
        %v465 = vsub.f32 %v395, %v464
        %v466 = vand.u32 %v465, 4294901760
        %v467 = vsub.f32 %v465, %v466
        %v468 = vand.u32 %v467, 4294901760
        %469 = vmatmul.mubr.f32.gmra.mxu0 %v468
        %v470 = vpop.f32.mrf.mxu0
        %v471 = vadd.f32 0.0, %v470
        %v472 = vpop.f32.mrf.mxu0
        %473 = vdwg.mxu0
        %474 = vmatprep.subr.mxu0 0.0
        %475 = vmatpush1.xpose.msra.mxu0 0.0
        %476 = vmatprep.subr.mxu0 0.0
        %477 = vmatpush1.xpose.msra.mxu0 0.0
        %478 = vmatprep.subr.mxu0 0.0
        %479 = vmatpush1.xpose.msra.mxu0 0.0
        %480 = vmatprep.subr.mxu0 0.0
        %481 = vmatpush1.xpose.msra.mxu0 0.0
        %482 = vmatprep.subr.mxu0 0.0
        %483 = vmatpush1.xpose.msra.mxu0 0.0
        %484 = vmatprep.subr.mxu0 0.0
        %485 = vmatpush1.xpose.msra.mxu0 0.0
        %486 = vmatprep.subr.mxu0 0.0
        %487 = vmatpush1.xpose.msra.mxu0 0.0
        %488 = vmatprep.subr.mxu0 0.0
        %489 = vmatpush1.xpose.msra.mxu0 0.0
        %490 = vmatprep.subr.mxu0 0.0
        %491 = vmatpush1.xpose.msra.mxu0 0.0
        %492 = vmatprep.subr.mxu0 0.0
        %493 = vmatpush1.xpose.msra.mxu0 0.0
        %494 = vmatprep.subr.mxu0 0.0
        %495 = vmatpush1.xpose.msra.mxu0 0.0
        %496 = vmatprep.subr.mxu0 0.0
        %497 = vmatpush1.xpose.msra.mxu0 0.0
        %498 = vmatprep.subr.mxu0 0.0
        %499 = vmatpush1.xpose.msra.mxu0 0.0
        %500 = vmatprep.subr.mxu0 0.0
        %501 = vmatpush1.xpose.msra.mxu0 0.0
        %502 = vmatprep.subr.mxu0 0.0
        %503 = vmatpush1.xpose.msra.mxu0 0.0
        %504 = vmatprep.subr.mxu0 0.0
        %v505 = vand.u32 %v395, 4294901760
        %v506 = vsub.f32 %v395, %v505
        %v507 = vand.u32 %v506, 4294901760
        %v508 = vsub.f32 %v506, %v507
        %v509 = vand.u32 %v508, 4294901760
        %510 = vmatpush1.xpose.msra.mxu0 %v509
        %511 = vmatprep.subr.mxu0 0.0
        %512 = vmatpush2.xpose.msra.mxu0 0.0
        %513 = vmatprep.subr.mxu0 0.0
        %514 = vmatpush2.xpose.msra.mxu0 0.0
        %515 = vmatprep.subr.mxu0 0.0
        %516 = vmatpush2.xpose.msra.mxu0 0.0
        %517 = vmatprep.subr.mxu0 0.0
        %518 = vmatpush2.xpose.msra.mxu0 0.0
        %519 = vmatprep.subr.mxu0 0.0
        %520 = vmatpush2.xpose.msra.mxu0 0.0
        %521 = vmatprep.subr.mxu0 0.0
        %522 = vmatpush2.xpose.msra.mxu0 0.0
        %523 = vmatprep.subr.mxu0 0.0
        %524 = vmatpush2.xpose.msra.mxu0 0.0
        %525 = vmatprep.subr.mxu0 0.0
        %526 = vmatpush2.xpose.msra.mxu0 0.0
        %527 = vmatprep.subr.mxu0 0.0
        %528 = vmatpush2.xpose.msra.mxu0 0.0
        %529 = vmatprep.subr.mxu0 0.0
        %530 = vmatpush2.xpose.msra.mxu0 0.0
        %531 = vmatprep.subr.mxu0 0.0
        %532 = vmatpush2.xpose.msra.mxu0 0.0
        %533 = vmatprep.subr.mxu0 0.0
        %534 = vmatpush2.xpose.msra.mxu0 0.0
        %535 = vmatprep.subr.mxu0 0.0
        %536 = vmatpush2.xpose.msra.mxu0 0.0
        %537 = vmatprep.subr.mxu0 0.0
        %538 = vmatpush2.xpose.msra.mxu0 0.0
        %539 = vmatprep.subr.mxu0 0.0
        %540 = vmatpush2.xpose.msra.mxu0 0.0
        %541 = vmatprep.subr.mxu0 0.0
        %542 = vmatpush2.xpose.msra.mxu0 0.0
        %543 = vmatprep.mubr.f32.mxu0 0.0
        %v544 = vand.u32 %v395, 4294901760
        %545 = vmatmul.mubr.f32.gmra.mxu0 %v544
        %v546 = vpop.f32.mrf.mxu0
        %v547 = vadd.f32 %v471, %v546
        %v548 = vpop.f32.mrf.mxu0
        %549 = vdwg.mxu0
        %550 = vmatprep.subr.mxu0 0.0
        %551 = vmatpush1.xpose.msra.mxu0 0.0
        %552 = vmatprep.subr.mxu0 0.0
        %553 = vmatpush1.xpose.msra.mxu0 0.0
        %554 = vmatprep.subr.mxu0 0.0
        %555 = vmatpush1.xpose.msra.mxu0 0.0
        %556 = vmatprep.subr.mxu0 0.0
        %557 = vmatpush1.xpose.msra.mxu0 0.0
        %558 = vmatprep.subr.mxu0 0.0
        %559 = vmatpush1.xpose.msra.mxu0 0.0
        %560 = vmatprep.subr.mxu0 0.0
        %561 = vmatpush1.xpose.msra.mxu0 0.0
        %562 = vmatprep.subr.mxu0 0.0
        %563 = vmatpush1.xpose.msra.mxu0 0.0
        %564 = vmatprep.subr.mxu0 0.0
        %565 = vmatpush1.xpose.msra.mxu0 0.0
        %566 = vmatprep.subr.mxu0 0.0
        %567 = vmatpush1.xpose.msra.mxu0 0.0
        %568 = vmatprep.subr.mxu0 0.0
        %569 = vmatpush1.xpose.msra.mxu0 0.0
        %570 = vmatprep.subr.mxu0 0.0
        %571 = vmatpush1.xpose.msra.mxu0 0.0
        %572 = vmatprep.subr.mxu0 0.0
        %573 = vmatpush1.xpose.msra.mxu0 0.0
        %574 = vmatprep.subr.mxu0 0.0
        %575 = vmatpush1.xpose.msra.mxu0 0.0
        %576 = vmatprep.subr.mxu0 0.0
        %577 = vmatpush1.xpose.msra.mxu0 0.0
        %578 = vmatprep.subr.mxu0 0.0
        %579 = vmatpush1.xpose.msra.mxu0 0.0
        %580 = vmatprep.subr.mxu0 0.0
        %v581 = vand.u32 %v395, 4294901760
        %v582 = vsub.f32 %v395, %v581
        %583 = vmatpush1.xpose.msra.mxu0 %v582
        %584 = vmatprep.subr.mxu0 0.0
        %585 = vmatpush2.xpose.msra.mxu0 0.0
        %586 = vmatprep.subr.mxu0 0.0
        %587 = vmatpush2.xpose.msra.mxu0 0.0
        %588 = vmatprep.subr.mxu0 0.0
        %589 = vmatpush2.xpose.msra.mxu0 0.0
        %590 = vmatprep.subr.mxu0 0.0
        %591 = vmatpush2.xpose.msra.mxu0 0.0
        %592 = vmatprep.subr.mxu0 0.0
        %593 = vmatpush2.xpose.msra.mxu0 0.0
        %594 = vmatprep.subr.mxu0 0.0
        %595 = vmatpush2.xpose.msra.mxu0 0.0
        %596 = vmatprep.subr.mxu0 0.0
        %597 = vmatpush2.xpose.msra.mxu0 0.0
        %598 = vmatprep.subr.mxu0 0.0
        %599 = vmatpush2.xpose.msra.mxu0 0.0
        %600 = vmatprep.subr.mxu0 0.0
        %601 = vmatpush2.xpose.msra.mxu0 0.0
        %602 = vmatprep.subr.mxu0 0.0
        %603 = vmatpush2.xpose.msra.mxu0 0.0
        %604 = vmatprep.subr.mxu0 0.0
        %605 = vmatpush2.xpose.msra.mxu0 0.0
        %606 = vmatprep.subr.mxu0 0.0
        %607 = vmatpush2.xpose.msra.mxu0 0.0
        %608 = vmatprep.subr.mxu0 0.0
        %609 = vmatpush2.xpose.msra.mxu0 0.0
        %610 = vmatprep.subr.mxu0 0.0
        %611 = vmatpush2.xpose.msra.mxu0 0.0
        %612 = vmatprep.subr.mxu0 0.0
        %613 = vmatpush2.xpose.msra.mxu0 0.0
        %614 = vmatprep.subr.mxu0 0.0
        %615 = vmatpush2.xpose.msra.mxu0 0.0
        %616 = vmatprep.mubr.f32.mxu0 0.0
        %v617 = vand.u32 %v395, 4294901760
        %v618 = vsub.f32 %v395, %v617
        %619 = vmatmul.mubr.f32.gmra.mxu0 %v618
        %v620 = vpop.f32.mrf.mxu0
        %v621 = vadd.f32 %v547, %v620
        %v622 = vpop.f32.mrf.mxu0
        %623 = vdwg.mxu0
        %624 = vmatprep.subr.mxu0 0.0
        %625 = vmatpush1.xpose.msra.mxu0 0.0
        %626 = vmatprep.subr.mxu0 0.0
        %627 = vmatpush1.xpose.msra.mxu0 0.0
        %628 = vmatprep.subr.mxu0 0.0
        %629 = vmatpush1.xpose.msra.mxu0 0.0
        %630 = vmatprep.subr.mxu0 0.0
        %631 = vmatpush1.xpose.msra.mxu0 0.0
        %632 = vmatprep.subr.mxu0 0.0
        %633 = vmatpush1.xpose.msra.mxu0 0.0
        %634 = vmatprep.subr.mxu0 0.0
        %635 = vmatpush1.xpose.msra.mxu0 0.0
        %636 = vmatprep.subr.mxu0 0.0
        %637 = vmatpush1.xpose.msra.mxu0 0.0
        %638 = vmatprep.subr.mxu0 0.0
        %639 = vmatpush1.xpose.msra.mxu0 0.0
        %640 = vmatprep.subr.mxu0 0.0
        %641 = vmatpush1.xpose.msra.mxu0 0.0
        %642 = vmatprep.subr.mxu0 0.0
        %643 = vmatpush1.xpose.msra.mxu0 0.0
        %644 = vmatprep.subr.mxu0 0.0
        %645 = vmatpush1.xpose.msra.mxu0 0.0
        %646 = vmatprep.subr.mxu0 0.0
        %647 = vmatpush1.xpose.msra.mxu0 0.0
        %648 = vmatprep.subr.mxu0 0.0
        %649 = vmatpush1.xpose.msra.mxu0 0.0
        %650 = vmatprep.subr.mxu0 0.0
        %651 = vmatpush1.xpose.msra.mxu0 0.0
        %652 = vmatprep.subr.mxu0 0.0
        %653 = vmatpush1.xpose.msra.mxu0 0.0
        %654 = vmatprep.subr.mxu0 0.0
        %v655 = vand.u32 %v395, 4294901760
        %656 = vmatpush1.xpose.msra.mxu0 %v655
        %657 = vmatprep.subr.mxu0 0.0
        %658 = vmatpush2.xpose.msra.mxu0 0.0
        %659 = vmatprep.subr.mxu0 0.0
        %660 = vmatpush2.xpose.msra.mxu0 0.0
        %661 = vmatprep.subr.mxu0 0.0
        %662 = vmatpush2.xpose.msra.mxu0 0.0
        %663 = vmatprep.subr.mxu0 0.0
        %664 = vmatpush2.xpose.msra.mxu0 0.0
        %665 = vmatprep.subr.mxu0 0.0
        %666 = vmatpush2.xpose.msra.mxu0 0.0
        %667 = vmatprep.subr.mxu0 0.0
        %668 = vmatpush2.xpose.msra.mxu0 0.0
        %669 = vmatprep.subr.mxu0 0.0
        %670 = vmatpush2.xpose.msra.mxu0 0.0
        %671 = vmatprep.subr.mxu0 0.0
        %672 = vmatpush2.xpose.msra.mxu0 0.0
        %673 = vmatprep.subr.mxu0 0.0
        %674 = vmatpush2.xpose.msra.mxu0 0.0
        %675 = vmatprep.subr.mxu0 0.0
        %676 = vmatpush2.xpose.msra.mxu0 0.0
        %677 = vmatprep.subr.mxu0 0.0
        %678 = vmatpush2.xpose.msra.mxu0 0.0
        %679 = vmatprep.subr.mxu0 0.0
        %680 = vmatpush2.xpose.msra.mxu0 0.0
        %681 = vmatprep.subr.mxu0 0.0
        %682 = vmatpush2.xpose.msra.mxu0 0.0
        %683 = vmatprep.subr.mxu0 0.0
        %684 = vmatpush2.xpose.msra.mxu0 0.0
        %685 = vmatprep.subr.mxu0 0.0
        %686 = vmatpush2.xpose.msra.mxu0 0.0
        %687 = vmatprep.subr.mxu0 0.0
        %688 = vmatpush2.xpose.msra.mxu0 0.0
        %689 = vmatprep.mubr.f32.mxu0 0.0
        %v690 = vand.u32 %v395, 4294901760
        %v691 = vsub.f32 %v395, %v690
        %v692 = vand.u32 %v691, 4294901760
        %693 = vmatmul.mubr.f32.gmra.mxu0 %v692
        %v694 = vpop.f32.mrf.mxu0
        %v695 = vadd.f32 %v621, %v694
        %v696 = vpop.f32.mrf.mxu0
        %697 = vdwg.mxu0
        %698 = vmatprep.subr.mxu0 0.0
        %699 = vmatpush1.xpose.msra.mxu0 0.0
        %700 = vmatprep.subr.mxu0 0.0
        %701 = vmatpush1.xpose.msra.mxu0 0.0
        %702 = vmatprep.subr.mxu0 0.0
        %703 = vmatpush1.xpose.msra.mxu0 0.0
        %704 = vmatprep.subr.mxu0 0.0
        %705 = vmatpush1.xpose.msra.mxu0 0.0
        %706 = vmatprep.subr.mxu0 0.0
        %707 = vmatpush1.xpose.msra.mxu0 0.0
        %708 = vmatprep.subr.mxu0 0.0
        %709 = vmatpush1.xpose.msra.mxu0 0.0
        %710 = vmatprep.subr.mxu0 0.0
        %711 = vmatpush1.xpose.msra.mxu0 0.0
        %712 = vmatprep.subr.mxu0 0.0
        %713 = vmatpush1.xpose.msra.mxu0 0.0
        %714 = vmatprep.subr.mxu0 0.0
        %715 = vmatpush1.xpose.msra.mxu0 0.0
        %716 = vmatprep.subr.mxu0 0.0
        %717 = vmatpush1.xpose.msra.mxu0 0.0
        %718 = vmatprep.subr.mxu0 0.0
        %719 = vmatpush1.xpose.msra.mxu0 0.0
        %720 = vmatprep.subr.mxu0 0.0
        %721 = vmatpush1.xpose.msra.mxu0 0.0
        %722 = vmatprep.subr.mxu0 0.0
        %723 = vmatpush1.xpose.msra.mxu0 0.0
        %724 = vmatprep.subr.mxu0 0.0
        %725 = vmatpush1.xpose.msra.mxu0 0.0
        %726 = vmatprep.subr.mxu0 0.0
        %727 = vmatpush1.xpose.msra.mxu0 0.0
        %728 = vmatprep.subr.mxu0 0.0
        %v729 = vand.u32 %v395, 4294901760
        %v730 = vsub.f32 %v395, %v729
        %v731 = vand.u32 %v730, 4294901760
        %732 = vmatpush1.xpose.msra.mxu0 %v731
        %733 = vmatprep.subr.mxu0 0.0
        %734 = vmatpush2.xpose.msra.mxu0 0.0
        %735 = vmatprep.subr.mxu0 0.0
        %736 = vmatpush2.xpose.msra.mxu0 0.0
        %737 = vmatprep.subr.mxu0 0.0
        %738 = vmatpush2.xpose.msra.mxu0 0.0
        %739 = vmatprep.subr.mxu0 0.0
        %740 = vmatpush2.xpose.msra.mxu0 0.0
        %741 = vmatprep.subr.mxu0 0.0
        %742 = vmatpush2.xpose.msra.mxu0 0.0
        %743 = vmatprep.subr.mxu0 0.0
        %744 = vmatpush2.xpose.msra.mxu0 0.0
        %745 = vmatprep.subr.mxu0 0.0
        %746 = vmatpush2.xpose.msra.mxu0 0.0
        %747 = vmatprep.subr.mxu0 0.0
        %748 = vmatpush2.xpose.msra.mxu0 0.0
        %749 = vmatprep.subr.mxu0 0.0
        %750 = vmatpush2.xpose.msra.mxu0 0.0
        %751 = vmatprep.subr.mxu0 0.0
        %752 = vmatpush2.xpose.msra.mxu0 0.0
        %753 = vmatprep.subr.mxu0 0.0
        %754 = vmatpush2.xpose.msra.mxu0 0.0
        %755 = vmatprep.subr.mxu0 0.0
        %756 = vmatpush2.xpose.msra.mxu0 0.0
        %757 = vmatprep.subr.mxu0 0.0
        %758 = vmatpush2.xpose.msra.mxu0 0.0
        %759 = vmatprep.subr.mxu0 0.0
        %760 = vmatpush2.xpose.msra.mxu0 0.0
        %761 = vmatprep.subr.mxu0 0.0
        %762 = vmatpush2.xpose.msra.mxu0 0.0
        %763 = vmatprep.subr.mxu0 0.0
        %764 = vmatpush2.xpose.msra.mxu0 0.0
        %765 = vmatprep.mubr.f32.mxu0 0.0
        %v766 = vand.u32 %v395, 4294901760
        %767 = vmatmul.mubr.f32.gmra.mxu0 %v766
        %v768 = vpop.f32.mrf.mxu0
        %v769 = vadd.f32 %v695, %v768
        %v770 = vpop.f32.mrf.mxu0
        %771 = vdwg.mxu0
        %772 = vmatprep.subr.mxu0 0.0
        %773 = vmatpush1.xpose.msra.mxu0 0.0
        %774 = vmatprep.subr.mxu0 0.0
        %775 = vmatpush1.xpose.msra.mxu0 0.0
        %776 = vmatprep.subr.mxu0 0.0
        %777 = vmatpush1.xpose.msra.mxu0 0.0
        %778 = vmatprep.subr.mxu0 0.0
        %779 = vmatpush1.xpose.msra.mxu0 0.0
        %780 = vmatprep.subr.mxu0 0.0
        %781 = vmatpush1.xpose.msra.mxu0 0.0
        %782 = vmatprep.subr.mxu0 0.0
        %783 = vmatpush1.xpose.msra.mxu0 0.0
        %784 = vmatprep.subr.mxu0 0.0
        %785 = vmatpush1.xpose.msra.mxu0 0.0
        %786 = vmatprep.subr.mxu0 0.0
        %787 = vmatpush1.xpose.msra.mxu0 0.0
        %788 = vmatprep.subr.mxu0 0.0
        %789 = vmatpush1.xpose.msra.mxu0 0.0
        %790 = vmatprep.subr.mxu0 0.0
        %791 = vmatpush1.xpose.msra.mxu0 0.0
        %792 = vmatprep.subr.mxu0 0.0
        %793 = vmatpush1.xpose.msra.mxu0 0.0
        %794 = vmatprep.subr.mxu0 0.0
        %795 = vmatpush1.xpose.msra.mxu0 0.0
        %796 = vmatprep.subr.mxu0 0.0
        %797 = vmatpush1.xpose.msra.mxu0 0.0
        %798 = vmatprep.subr.mxu0 0.0
        %799 = vmatpush1.xpose.msra.mxu0 0.0
        %800 = vmatprep.subr.mxu0 0.0
        %801 = vmatpush1.xpose.msra.mxu0 0.0
        %802 = vmatprep.subr.mxu0 0.0
        %v803 = vand.u32 %v395, 4294901760
        %804 = vmatpush1.xpose.msra.mxu0 %v803
        %805 = vmatprep.subr.mxu0 0.0
        %806 = vmatpush2.xpose.msra.mxu0 0.0
        %807 = vmatprep.subr.mxu0 0.0
        %808 = vmatpush2.xpose.msra.mxu0 0.0
        %809 = vmatprep.subr.mxu0 0.0
        %810 = vmatpush2.xpose.msra.mxu0 0.0
        %811 = vmatprep.subr.mxu0 0.0
        %812 = vmatpush2.xpose.msra.mxu0 0.0
        %813 = vmatprep.subr.mxu0 0.0
        %814 = vmatpush2.xpose.msra.mxu0 0.0
        %815 = vmatprep.subr.mxu0 0.0
        %816 = vmatpush2.xpose.msra.mxu0 0.0
        %817 = vmatprep.subr.mxu0 0.0
        %818 = vmatpush2.xpose.msra.mxu0 0.0
        %819 = vmatprep.subr.mxu0 0.0
        %820 = vmatpush2.xpose.msra.mxu0 0.0
        %821 = vmatprep.subr.mxu0 0.0
        %822 = vmatpush2.xpose.msra.mxu0 0.0
        %823 = vmatprep.subr.mxu0 0.0
        %824 = vmatpush2.xpose.msra.mxu0 0.0
        %825 = vmatprep.subr.mxu0 0.0
        %826 = vmatpush2.xpose.msra.mxu0 0.0
        %827 = vmatprep.subr.mxu0 0.0
        %828 = vmatpush2.xpose.msra.mxu0 0.0
        %829 = vmatprep.subr.mxu0 0.0
        %830 = vmatpush2.xpose.msra.mxu0 0.0
        %831 = vmatprep.subr.mxu0 0.0
        %832 = vmatpush2.xpose.msra.mxu0 0.0
        %833 = vmatprep.subr.mxu0 0.0
        %834 = vmatpush2.xpose.msra.mxu0 0.0
        %835 = vmatprep.subr.mxu0 0.0
        %836 = vmatpush2.xpose.msra.mxu0 0.0
        %837 = vmatprep.mubr.f32.mxu0 0.0
        %v838 = vand.u32 %v395, 4294901760
        %839 = vmatmul.mubr.f32.gmra.mxu0 %v838
        %v840 = vpop.f32.mrf.mxu0
        %v841 = vadd.f32 %v769, %v840
        %v842 = vpop.f32.mrf.mxu0
        %843 = vdwg.mxu0
        %v844 = vadd.f32 %v397, %v841
        %vm845 = vcmask 64512
        %846 = vst.msk [vmem:[%s324] sm:$0xff] %vm845, %v844
        %v847 = vld [vmem:[%s366] sm:$0xff]
        %848 = vmatprep.subr.mxu0 0.0
        %849 = vmatpush1.xpose.msra.mxu0 0.0
        %850 = vmatprep.subr.mxu0 0.0
        %851 = vmatpush1.xpose.msra.mxu0 0.0
        %852 = vmatprep.subr.mxu0 0.0
        %853 = vmatpush1.xpose.msra.mxu0 0.0
        %854 = vmatprep.subr.mxu0 0.0
        %855 = vmatpush1.xpose.msra.mxu0 0.0
        %856 = vmatprep.subr.mxu0 0.0
        %857 = vmatpush1.xpose.msra.mxu0 0.0
        %858 = vmatprep.subr.mxu0 0.0
        %859 = vmatpush1.xpose.msra.mxu0 0.0
        %860 = vmatprep.subr.mxu0 0.0
        %861 = vmatpush1.xpose.msra.mxu0 0.0
        %862 = vmatprep.subr.mxu0 0.0
        %863 = vmatpush1.xpose.msra.mxu0 0.0
        %864 = vmatprep.subr.mxu0 0.0
        %865 = vmatpush1.xpose.msra.mxu0 0.0
        %866 = vmatprep.subr.mxu0 0.0
        %867 = vmatpush1.xpose.msra.mxu0 0.0
        %868 = vmatprep.subr.mxu0 0.0
        %869 = vmatpush1.xpose.msra.mxu0 0.0
        %870 = vmatprep.subr.mxu0 0.0
        %871 = vmatpush1.xpose.msra.mxu0 0.0
        %872 = vmatprep.subr.mxu0 0.0
        %873 = vmatpush1.xpose.msra.mxu0 0.0
        %874 = vmatprep.subr.mxu0 0.0
        %875 = vmatpush1.xpose.msra.mxu0 0.0
        %876 = vmatprep.subr.mxu0 0.0
        %877 = vmatpush1.xpose.msra.mxu0 0.0
        %878 = vmatprep.subr.mxu0 0.0
        %v879 = vand.u32 %v396, 4294901760
        %880 = vmatpush1.xpose.msra.mxu0 %v879
        %881 = vmatprep.subr.mxu0 0.0
        %882 = vmatpush2.xpose.msra.mxu0 0.0
        %883 = vmatprep.subr.mxu0 0.0
        %884 = vmatpush2.xpose.msra.mxu0 0.0
        %885 = vmatprep.subr.mxu0 0.0
        %886 = vmatpush2.xpose.msra.mxu0 0.0
        %887 = vmatprep.subr.mxu0 0.0
        %888 = vmatpush2.xpose.msra.mxu0 0.0
        %889 = vmatprep.subr.mxu0 0.0
        %890 = vmatpush2.xpose.msra.mxu0 0.0
        %891 = vmatprep.subr.mxu0 0.0
        %892 = vmatpush2.xpose.msra.mxu0 0.0
        %893 = vmatprep.subr.mxu0 0.0
        %894 = vmatpush2.xpose.msra.mxu0 0.0
        %895 = vmatprep.subr.mxu0 0.0
        %896 = vmatpush2.xpose.msra.mxu0 0.0
        %897 = vmatprep.subr.mxu0 0.0
        %898 = vmatpush2.xpose.msra.mxu0 0.0
        %899 = vmatprep.subr.mxu0 0.0
        %900 = vmatpush2.xpose.msra.mxu0 0.0
        %901 = vmatprep.subr.mxu0 0.0
        %902 = vmatpush2.xpose.msra.mxu0 0.0
        %903 = vmatprep.subr.mxu0 0.0
        %904 = vmatpush2.xpose.msra.mxu0 0.0
        %905 = vmatprep.subr.mxu0 0.0
        %906 = vmatpush2.xpose.msra.mxu0 0.0
        %907 = vmatprep.subr.mxu0 0.0
        %908 = vmatpush2.xpose.msra.mxu0 0.0
        %909 = vmatprep.subr.mxu0 0.0
        %910 = vmatpush2.xpose.msra.mxu0 0.0
        %911 = vmatprep.subr.mxu0 0.0
        %912 = vmatpush2.xpose.msra.mxu0 0.0
        %913 = vmatprep.mubr.f32.mxu0 0.0
        %v914 = vand.u32 %v395, 4294901760
        %v915 = vsub.f32 %v395, %v914
        %v916 = vand.u32 %v915, 4294901760
        %v917 = vsub.f32 %v915, %v916
        %v918 = vand.u32 %v917, 4294901760
        %919 = vmatmul.mubr.f32.gmra.mxu0 %v918
        %v920 = vpop.f32.mrf.mxu0
        %v921 = vadd.f32 0.0, %v920
        %v922 = vpop.f32.mrf.mxu0
        %923 = vdwg.mxu0
        %924 = vmatprep.subr.mxu0 0.0
        %925 = vmatpush1.xpose.msra.mxu0 0.0
        %926 = vmatprep.subr.mxu0 0.0
        %927 = vmatpush1.xpose.msra.mxu0 0.0
        %928 = vmatprep.subr.mxu0 0.0
        %929 = vmatpush1.xpose.msra.mxu0 0.0
        %930 = vmatprep.subr.mxu0 0.0
        %931 = vmatpush1.xpose.msra.mxu0 0.0
        %932 = vmatprep.subr.mxu0 0.0
        %933 = vmatpush1.xpose.msra.mxu0 0.0
        %934 = vmatprep.subr.mxu0 0.0
        %935 = vmatpush1.xpose.msra.mxu0 0.0
        %936 = vmatprep.subr.mxu0 0.0
        %937 = vmatpush1.xpose.msra.mxu0 0.0
        %938 = vmatprep.subr.mxu0 0.0
        %939 = vmatpush1.xpose.msra.mxu0 0.0
        %940 = vmatprep.subr.mxu0 0.0
        %941 = vmatpush1.xpose.msra.mxu0 0.0
        %942 = vmatprep.subr.mxu0 0.0
        %943 = vmatpush1.xpose.msra.mxu0 0.0
        %944 = vmatprep.subr.mxu0 0.0
        %945 = vmatpush1.xpose.msra.mxu0 0.0
        %946 = vmatprep.subr.mxu0 0.0
        %947 = vmatpush1.xpose.msra.mxu0 0.0
        %948 = vmatprep.subr.mxu0 0.0
        %949 = vmatpush1.xpose.msra.mxu0 0.0
        %950 = vmatprep.subr.mxu0 0.0
        %951 = vmatpush1.xpose.msra.mxu0 0.0
        %952 = vmatprep.subr.mxu0 0.0
        %953 = vmatpush1.xpose.msra.mxu0 0.0
        %954 = vmatprep.subr.mxu0 0.0
        %v955 = vand.u32 %v396, 4294901760
        %v956 = vsub.f32 %v396, %v955
        %v957 = vand.u32 %v956, 4294901760
        %v958 = vsub.f32 %v956, %v957
        %v959 = vand.u32 %v958, 4294901760
        %960 = vmatpush1.xpose.msra.mxu0 %v959
        %961 = vmatprep.subr.mxu0 0.0
        %962 = vmatpush2.xpose.msra.mxu0 0.0
        %963 = vmatprep.subr.mxu0 0.0
        %964 = vmatpush2.xpose.msra.mxu0 0.0
        %965 = vmatprep.subr.mxu0 0.0
        %966 = vmatpush2.xpose.msra.mxu0 0.0
        %967 = vmatprep.subr.mxu0 0.0
        %968 = vmatpush2.xpose.msra.mxu0 0.0
        %969 = vmatprep.subr.mxu0 0.0
        %970 = vmatpush2.xpose.msra.mxu0 0.0
        %971 = vmatprep.subr.mxu0 0.0
        %972 = vmatpush2.xpose.msra.mxu0 0.0
        %973 = vmatprep.subr.mxu0 0.0
        %974 = vmatpush2.xpose.msra.mxu0 0.0
        %975 = vmatprep.subr.mxu0 0.0
        %976 = vmatpush2.xpose.msra.mxu0 0.0
        %977 = vmatprep.subr.mxu0 0.0
        %978 = vmatpush2.xpose.msra.mxu0 0.0
        %979 = vmatprep.subr.mxu0 0.0
        %980 = vmatpush2.xpose.msra.mxu0 0.0
        %981 = vmatprep.subr.mxu0 0.0
        %982 = vmatpush2.xpose.msra.mxu0 0.0
        %983 = vmatprep.subr.mxu0 0.0
        %984 = vmatpush2.xpose.msra.mxu0 0.0
        %985 = vmatprep.subr.mxu0 0.0
        %986 = vmatpush2.xpose.msra.mxu0 0.0
        %987 = vmatprep.subr.mxu0 0.0
        %988 = vmatpush2.xpose.msra.mxu0 0.0
        %989 = vmatprep.subr.mxu0 0.0
        %990 = vmatpush2.xpose.msra.mxu0 0.0
        %991 = vmatprep.subr.mxu0 0.0
        %992 = vmatpush2.xpose.msra.mxu0 0.0
        %993 = vmatprep.mubr.f32.mxu0 0.0
        %v994 = vand.u32 %v395, 4294901760
        %995 = vmatmul.mubr.f32.gmra.mxu0 %v994
        %v996 = vpop.f32.mrf.mxu0
        %v997 = vadd.f32 %v921, %v996
        %v998 = vpop.f32.mrf.mxu0
        %999 = vdwg.mxu0
        %1000 = vmatprep.subr.mxu0 0.0
        %1001 = vmatpush1.xpose.msra.mxu0 0.0
        %1002 = vmatprep.subr.mxu0 0.0
        %1003 = vmatpush1.xpose.msra.mxu0 0.0
        %1004 = vmatprep.subr.mxu0 0.0
        %1005 = vmatpush1.xpose.msra.mxu0 0.0
        %1006 = vmatprep.subr.mxu0 0.0
        %1007 = vmatpush1.xpose.msra.mxu0 0.0
        %1008 = vmatprep.subr.mxu0 0.0
        %1009 = vmatpush1.xpose.msra.mxu0 0.0
        %1010 = vmatprep.subr.mxu0 0.0
        %1011 = vmatpush1.xpose.msra.mxu0 0.0
        %1012 = vmatprep.subr.mxu0 0.0
        %1013 = vmatpush1.xpose.msra.mxu0 0.0
        %1014 = vmatprep.subr.mxu0 0.0
        %1015 = vmatpush1.xpose.msra.mxu0 0.0
        %1016 = vmatprep.subr.mxu0 0.0
        %1017 = vmatpush1.xpose.msra.mxu0 0.0
        %1018 = vmatprep.subr.mxu0 0.0
        %1019 = vmatpush1.xpose.msra.mxu0 0.0
        %1020 = vmatprep.subr.mxu0 0.0
        %1021 = vmatpush1.xpose.msra.mxu0 0.0
        %1022 = vmatprep.subr.mxu0 0.0
        %1023 = vmatpush1.xpose.msra.mxu0 0.0
        %1024 = vmatprep.subr.mxu0 0.0
        %1025 = vmatpush1.xpose.msra.mxu0 0.0
        %1026 = vmatprep.subr.mxu0 0.0
        %1027 = vmatpush1.xpose.msra.mxu0 0.0
        %1028 = vmatprep.subr.mxu0 0.0
        %1029 = vmatpush1.xpose.msra.mxu0 0.0
        %1030 = vmatprep.subr.mxu0 0.0
        %v1031 = vand.u32 %v396, 4294901760
        %v1032 = vsub.f32 %v396, %v1031
        %1033 = vmatpush1.xpose.msra.mxu0 %v1032
        %1034 = vmatprep.subr.mxu0 0.0
        %1035 = vmatpush2.xpose.msra.mxu0 0.0
        %1036 = vmatprep.subr.mxu0 0.0
        %1037 = vmatpush2.xpose.msra.mxu0 0.0
        %1038 = vmatprep.subr.mxu0 0.0
        %1039 = vmatpush2.xpose.msra.mxu0 0.0
        %1040 = vmatprep.subr.mxu0 0.0
        %1041 = vmatpush2.xpose.msra.mxu0 0.0
        %1042 = vmatprep.subr.mxu0 0.0
        %1043 = vmatpush2.xpose.msra.mxu0 0.0
        %1044 = vmatprep.subr.mxu0 0.0
        %1045 = vmatpush2.xpose.msra.mxu0 0.0
        %1046 = vmatprep.subr.mxu0 0.0
        %1047 = vmatpush2.xpose.msra.mxu0 0.0
        %1048 = vmatprep.subr.mxu0 0.0
        %1049 = vmatpush2.xpose.msra.mxu0 0.0
        %1050 = vmatprep.subr.mxu0 0.0
        %1051 = vmatpush2.xpose.msra.mxu0 0.0
        %1052 = vmatprep.subr.mxu0 0.0
        %1053 = vmatpush2.xpose.msra.mxu0 0.0
        %1054 = vmatprep.subr.mxu0 0.0
        %1055 = vmatpush2.xpose.msra.mxu0 0.0
        %1056 = vmatprep.subr.mxu0 0.0
        %1057 = vmatpush2.xpose.msra.mxu0 0.0
        %1058 = vmatprep.subr.mxu0 0.0
        %1059 = vmatpush2.xpose.msra.mxu0 0.0
        %1060 = vmatprep.subr.mxu0 0.0
        %1061 = vmatpush2.xpose.msra.mxu0 0.0
        %1062 = vmatprep.subr.mxu0 0.0
        %1063 = vmatpush2.xpose.msra.mxu0 0.0
        %1064 = vmatprep.subr.mxu0 0.0
        %1065 = vmatpush2.xpose.msra.mxu0 0.0
        %1066 = vmatprep.mubr.f32.mxu0 0.0
        %v1067 = vand.u32 %v395, 4294901760
        %v1068 = vsub.f32 %v395, %v1067
        %1069 = vmatmul.mubr.f32.gmra.mxu0 %v1068
        %v1070 = vpop.f32.mrf.mxu0
        %v1071 = vadd.f32 %v997, %v1070
        %v1072 = vpop.f32.mrf.mxu0
        %1073 = vdwg.mxu0
        %1074 = vmatprep.subr.mxu0 0.0
        %1075 = vmatpush1.xpose.msra.mxu0 0.0
        %1076 = vmatprep.subr.mxu0 0.0
        %1077 = vmatpush1.xpose.msra.mxu0 0.0
        %1078 = vmatprep.subr.mxu0 0.0
        %1079 = vmatpush1.xpose.msra.mxu0 0.0
        %1080 = vmatprep.subr.mxu0 0.0
        %1081 = vmatpush1.xpose.msra.mxu0 0.0
        %1082 = vmatprep.subr.mxu0 0.0
        %1083 = vmatpush1.xpose.msra.mxu0 0.0
        %1084 = vmatprep.subr.mxu0 0.0
        %1085 = vmatpush1.xpose.msra.mxu0 0.0
        %1086 = vmatprep.subr.mxu0 0.0
        %1087 = vmatpush1.xpose.msra.mxu0 0.0
        %1088 = vmatprep.subr.mxu0 0.0
        %1089 = vmatpush1.xpose.msra.mxu0 0.0
        %1090 = vmatprep.subr.mxu0 0.0
        %1091 = vmatpush1.xpose.msra.mxu0 0.0
        %1092 = vmatprep.subr.mxu0 0.0
        %1093 = vmatpush1.xpose.msra.mxu0 0.0
        %1094 = vmatprep.subr.mxu0 0.0
        %1095 = vmatpush1.xpose.msra.mxu0 0.0
        %1096 = vmatprep.subr.mxu0 0.0
        %1097 = vmatpush1.xpose.msra.mxu0 0.0
        %1098 = vmatprep.subr.mxu0 0.0
        %1099 = vmatpush1.xpose.msra.mxu0 0.0
        %1100 = vmatprep.subr.mxu0 0.0
        %1101 = vmatpush1.xpose.msra.mxu0 0.0
        %1102 = vmatprep.subr.mxu0 0.0
        %1103 = vmatpush1.xpose.msra.mxu0 0.0
        %1104 = vmatprep.subr.mxu0 0.0
        %v1105 = vand.u32 %v396, 4294901760
        %1106 = vmatpush1.xpose.msra.mxu0 %v1105
        %1107 = vmatprep.subr.mxu0 0.0
        %1108 = vmatpush2.xpose.msra.mxu0 0.0
        %1109 = vmatprep.subr.mxu0 0.0
        %1110 = vmatpush2.xpose.msra.mxu0 0.0
        %1111 = vmatprep.subr.mxu0 0.0
        %1112 = vmatpush2.xpose.msra.mxu0 0.0
        %1113 = vmatprep.subr.mxu0 0.0
        %1114 = vmatpush2.xpose.msra.mxu0 0.0
        %1115 = vmatprep.subr.mxu0 0.0
        %1116 = vmatpush2.xpose.msra.mxu0 0.0
        %1117 = vmatprep.subr.mxu0 0.0
        %1118 = vmatpush2.xpose.msra.mxu0 0.0
        %1119 = vmatprep.subr.mxu0 0.0
        %1120 = vmatpush2.xpose.msra.mxu0 0.0
        %1121 = vmatprep.subr.mxu0 0.0
        %1122 = vmatpush2.xpose.msra.mxu0 0.0
        %1123 = vmatprep.subr.mxu0 0.0
        %1124 = vmatpush2.xpose.msra.mxu0 0.0
        %1125 = vmatprep.subr.mxu0 0.0
        %1126 = vmatpush2.xpose.msra.mxu0 0.0
        %1127 = vmatprep.subr.mxu0 0.0
        %1128 = vmatpush2.xpose.msra.mxu0 0.0
        %1129 = vmatprep.subr.mxu0 0.0
        %1130 = vmatpush2.xpose.msra.mxu0 0.0
        %1131 = vmatprep.subr.mxu0 0.0
        %1132 = vmatpush2.xpose.msra.mxu0 0.0
        %1133 = vmatprep.subr.mxu0 0.0
        %1134 = vmatpush2.xpose.msra.mxu0 0.0
        %1135 = vmatprep.subr.mxu0 0.0
        %1136 = vmatpush2.xpose.msra.mxu0 0.0
        %1137 = vmatprep.subr.mxu0 0.0
        %1138 = vmatpush2.xpose.msra.mxu0 0.0
        %1139 = vmatprep.mubr.f32.mxu0 0.0
        %v1140 = vand.u32 %v395, 4294901760
        %v1141 = vsub.f32 %v395, %v1140
        %v1142 = vand.u32 %v1141, 4294901760
        %1143 = vmatmul.mubr.f32.gmra.mxu0 %v1142
        %v1144 = vpop.f32.mrf.mxu0
        %v1145 = vadd.f32 %v1071, %v1144
        %v1146 = vpop.f32.mrf.mxu0
        %1147 = vdwg.mxu0
        %1148 = vmatprep.subr.mxu0 0.0
        %1149 = vmatpush1.xpose.msra.mxu0 0.0
        %1150 = vmatprep.subr.mxu0 0.0
        %1151 = vmatpush1.xpose.msra.mxu0 0.0
        %1152 = vmatprep.subr.mxu0 0.0
        %1153 = vmatpush1.xpose.msra.mxu0 0.0
        %1154 = vmatprep.subr.mxu0 0.0
        %1155 = vmatpush1.xpose.msra.mxu0 0.0
        %1156 = vmatprep.subr.mxu0 0.0
        %1157 = vmatpush1.xpose.msra.mxu0 0.0
        %1158 = vmatprep.subr.mxu0 0.0
        %1159 = vmatpush1.xpose.msra.mxu0 0.0
        %1160 = vmatprep.subr.mxu0 0.0
        %1161 = vmatpush1.xpose.msra.mxu0 0.0
        %1162 = vmatprep.subr.mxu0 0.0
        %1163 = vmatpush1.xpose.msra.mxu0 0.0
        %1164 = vmatprep.subr.mxu0 0.0
        %1165 = vmatpush1.xpose.msra.mxu0 0.0
        %1166 = vmatprep.subr.mxu0 0.0
        %1167 = vmatpush1.xpose.msra.mxu0 0.0
        %1168 = vmatprep.subr.mxu0 0.0
        %1169 = vmatpush1.xpose.msra.mxu0 0.0
        %1170 = vmatprep.subr.mxu0 0.0
        %1171 = vmatpush1.xpose.msra.mxu0 0.0
        %1172 = vmatprep.subr.mxu0 0.0
        %1173 = vmatpush1.xpose.msra.mxu0 0.0
        %1174 = vmatprep.subr.mxu0 0.0
        %1175 = vmatpush1.xpose.msra.mxu0 0.0
        %1176 = vmatprep.subr.mxu0 0.0
        %1177 = vmatpush1.xpose.msra.mxu0 0.0
        %1178 = vmatprep.subr.mxu0 0.0
        %v1179 = vand.u32 %v396, 4294901760
        %v1180 = vsub.f32 %v396, %v1179
        %v1181 = vand.u32 %v1180, 4294901760
        %1182 = vmatpush1.xpose.msra.mxu0 %v1181
        %1183 = vmatprep.subr.mxu0 0.0
        %1184 = vmatpush2.xpose.msra.mxu0 0.0
        %1185 = vmatprep.subr.mxu0 0.0
        %1186 = vmatpush2.xpose.msra.mxu0 0.0
        %1187 = vmatprep.subr.mxu0 0.0
        %1188 = vmatpush2.xpose.msra.mxu0 0.0
        %1189 = vmatprep.subr.mxu0 0.0
        %1190 = vmatpush2.xpose.msra.mxu0 0.0
        %1191 = vmatprep.subr.mxu0 0.0
        %1192 = vmatpush2.xpose.msra.mxu0 0.0
        %1193 = vmatprep.subr.mxu0 0.0
        %1194 = vmatpush2.xpose.msra.mxu0 0.0
        %1195 = vmatprep.subr.mxu0 0.0
        %1196 = vmatpush2.xpose.msra.mxu0 0.0
        %1197 = vmatprep.subr.mxu0 0.0
        %1198 = vmatpush2.xpose.msra.mxu0 0.0
        %1199 = vmatprep.subr.mxu0 0.0
        %1200 = vmatpush2.xpose.msra.mxu0 0.0
        %1201 = vmatprep.subr.mxu0 0.0
        %1202 = vmatpush2.xpose.msra.mxu0 0.0
        %1203 = vmatprep.subr.mxu0 0.0
        %1204 = vmatpush2.xpose.msra.mxu0 0.0
        %1205 = vmatprep.subr.mxu0 0.0
        %1206 = vmatpush2.xpose.msra.mxu0 0.0
        %1207 = vmatprep.subr.mxu0 0.0
        %1208 = vmatpush2.xpose.msra.mxu0 0.0
        %1209 = vmatprep.subr.mxu0 0.0
        %1210 = vmatpush2.xpose.msra.mxu0 0.0
        %1211 = vmatprep.subr.mxu0 0.0
        %1212 = vmatpush2.xpose.msra.mxu0 0.0
        %1213 = vmatprep.subr.mxu0 0.0
        %1214 = vmatpush2.xpose.msra.mxu0 0.0
        %1215 = vmatprep.mubr.f32.mxu0 0.0
        %v1216 = vand.u32 %v395, 4294901760
        %1217 = vmatmul.mubr.f32.gmra.mxu0 %v1216
        %v1218 = vpop.f32.mrf.mxu0
        %v1219 = vadd.f32 %v1145, %v1218
        %v1220 = vpop.f32.mrf.mxu0
        %1221 = vdwg.mxu0
        %1222 = vmatprep.subr.mxu0 0.0
        %1223 = vmatpush1.xpose.msra.mxu0 0.0
        %1224 = vmatprep.subr.mxu0 0.0
        %1225 = vmatpush1.xpose.msra.mxu0 0.0
        %1226 = vmatprep.subr.mxu0 0.0
        %1227 = vmatpush1.xpose.msra.mxu0 0.0
        %1228 = vmatprep.subr.mxu0 0.0
        %1229 = vmatpush1.xpose.msra.mxu0 0.0
        %1230 = vmatprep.subr.mxu0 0.0
        %1231 = vmatpush1.xpose.msra.mxu0 0.0
        %1232 = vmatprep.subr.mxu0 0.0
        %1233 = vmatpush1.xpose.msra.mxu0 0.0
        %1234 = vmatprep.subr.mxu0 0.0
        %1235 = vmatpush1.xpose.msra.mxu0 0.0
        %1236 = vmatprep.subr.mxu0 0.0
        %1237 = vmatpush1.xpose.msra.mxu0 0.0
        %1238 = vmatprep.subr.mxu0 0.0
        %1239 = vmatpush1.xpose.msra.mxu0 0.0
        %1240 = vmatprep.subr.mxu0 0.0
        %1241 = vmatpush1.xpose.msra.mxu0 0.0
        %1242 = vmatprep.subr.mxu0 0.0
        %1243 = vmatpush1.xpose.msra.mxu0 0.0
        %1244 = vmatprep.subr.mxu0 0.0
        %1245 = vmatpush1.xpose.msra.mxu0 0.0
        %1246 = vmatprep.subr.mxu0 0.0
        %1247 = vmatpush1.xpose.msra.mxu0 0.0
        %1248 = vmatprep.subr.mxu0 0.0
        %1249 = vmatpush1.xpose.msra.mxu0 0.0
        %1250 = vmatprep.subr.mxu0 0.0
        %1251 = vmatpush1.xpose.msra.mxu0 0.0
        %1252 = vmatprep.subr.mxu0 0.0
        %v1253 = vand.u32 %v396, 4294901760
        %1254 = vmatpush1.xpose.msra.mxu0 %v1253
        %1255 = vmatprep.subr.mxu0 0.0
        %1256 = vmatpush2.xpose.msra.mxu0 0.0
        %1257 = vmatprep.subr.mxu0 0.0
        %1258 = vmatpush2.xpose.msra.mxu0 0.0
        %1259 = vmatprep.subr.mxu0 0.0
        %1260 = vmatpush2.xpose.msra.mxu0 0.0
        %1261 = vmatprep.subr.mxu0 0.0
        %1262 = vmatpush2.xpose.msra.mxu0 0.0
        %1263 = vmatprep.subr.mxu0 0.0
        %1264 = vmatpush2.xpose.msra.mxu0 0.0
        %1265 = vmatprep.subr.mxu0 0.0
        %1266 = vmatpush2.xpose.msra.mxu0 0.0
        %1267 = vmatprep.subr.mxu0 0.0
        %1268 = vmatpush2.xpose.msra.mxu0 0.0
        %1269 = vmatprep.subr.mxu0 0.0
        %1270 = vmatpush2.xpose.msra.mxu0 0.0
        %1271 = vmatprep.subr.mxu0 0.0
        %1272 = vmatpush2.xpose.msra.mxu0 0.0
        %1273 = vmatprep.subr.mxu0 0.0
        %1274 = vmatpush2.xpose.msra.mxu0 0.0
        %1275 = vmatprep.subr.mxu0 0.0
        %1276 = vmatpush2.xpose.msra.mxu0 0.0
        %1277 = vmatprep.subr.mxu0 0.0
        %1278 = vmatpush2.xpose.msra.mxu0 0.0
        %1279 = vmatprep.subr.mxu0 0.0
        %1280 = vmatpush2.xpose.msra.mxu0 0.0
        %1281 = vmatprep.subr.mxu0 0.0
        %1282 = vmatpush2.xpose.msra.mxu0 0.0
        %1283 = vmatprep.subr.mxu0 0.0
        %1284 = vmatpush2.xpose.msra.mxu0 0.0
        %1285 = vmatprep.subr.mxu0 0.0
        %1286 = vmatpush2.xpose.msra.mxu0 0.0
        %1287 = vmatprep.mubr.f32.mxu0 0.0
        %v1288 = vand.u32 %v395, 4294901760
        %1289 = vmatmul.mubr.f32.gmra.mxu0 %v1288
        %v1290 = vpop.f32.mrf.mxu0
        %v1291 = vadd.f32 %v1219, %v1290
        %v1292 = vpop.f32.mrf.mxu0
        %1293 = vdwg.mxu0
        %v1294 = vadd.f32 %v847, %v1291
        %vm1295 = vcmask 31744
        %1296 = vst.msk [vmem:[%s366] sm:$0xff] %vm1295, %v1294
        %v1297 = vld [vmem:[%s374] sm:$0xff]
        %1298 = vadd.xlane.f32.xlu0 %v395
        %v1299 = vpop.xlane.xlu0 %1298
        %v1300 = vadd.f32 %v1297, %v1299
        %vm1301 = vcmask 7168
        %1302 = vst.msk [vmem:[%s374] sm:$0xff] %vm1301, %v1300
        %v1303 = vld [vmem:[%s382] sm:$0xf]
        %vm1304 = vcmask 1043456
        %v1305 = vsel %vm1304, %v396, 0.0
        %1306 = vadd.xlane.f32.xlu0 %v1305
        %v1307 = vpop.xlane.xlu0 %1306
        %v1308 = vadd.f32 %v1303, %v1307
        %vm1309 = vcmask 3072
        %1310 = vst.msk [vmem:[%s382] sm:$0xf] %vm1309, %v1308
        %s1311 = sand.u32 %s119, 1
        %s1312 = scalar_lea.sflag [#allocation4], %s1311
        %s1313 = sand.u32 %s119, 1
        %s1314 = smul.addr %s1313, 8
        %s1315 = scalar_lea.vmem [#allocation7], %s1314
        %p1316 = scmp.lt.s32.totalorder %s32, 0
        %s1317 = scalar_select %p1316, %s32, 0
        %p1318 = scmp.lt.s32.totalorder %s31, 1
        %s1319 = scalar_select %p1318, %s31, 1
        %s1320 = smul.addr %s1317, 2
        %s1321 = sadd.s32 %s1319, %s1320
        %s1322 = smul.addr %s1321, 8
        %s1323 = scalar_lea.vmem %s3, %s1322
        %p1324 = scmp.lt.s32.totalorder %s32, 0
        %s1325 = scalar_select %p1324, %s32, 0
        %p1326 = scmp.lt.s32.totalorder %s31, 1
        %s1327 = scalar_select %p1326, %s31, 1
        %s1328 = smul.addr %s1325, 2
        %s1329 = sadd.s32 %s1327, %s1328
        %s1330 = smul.addr %s1329, 8
        %s1331 = scalar_lea.vmem %s4, %s1330
        %p1332 = scmp.lt.s32.totalorder %s32, 0
        %s1333 = scalar_select %p1332, %s32, 0
        %p1334 = scmp.lt.s32.totalorder %s31, 1
        %s1335 = scalar_select %p1334, %s31, 1
        %s1336 = smul.addr %s1333, 2
        %s1337 = sadd.s32 %s1335, %s1336
        %s1338 = smul.addr %s1337, 4
        %s1339 = scalar_lea.vmem %s5, %s1338
        // Predicated region
        $region41: #{tpu_custom_call.1} parent=27 // pred_check
          %p1340 = pneg %p129
        $region42: #{tpu_custom_call.1} parent=27 // pred_check_branch
          %1342 = sbr.rel (%p1340) target = $region44
        $region43: #{tpu_custom_call.1} parent=27 // pred_region
          %s1344 = ssub.s32 128, 128
          %1345 = vsyncadd %s1312, %s1344
          %s1346 = smul.addr %s32, 2
          %s1347 = sadd.s32 %s31, %s1346
          %s1348 = smul.addr %s1347, 128
          %s1349 = scalar_lea.hbm %s2, %s1348
          %s1351 = sshll.u32 %s1315, 4
          %s1352 = int_to_ptr.vmem [resolvable:$true] %s1351
          %1354 = dma.vmem_to_hbm [thread:$0]  %s1352, 128, %s1349, %s1312
        $region44: #{tpu_custom_call.1} parent=27 // pred_fallthru
          _
        // Predicated region
        $region45: #{tpu_custom_call.1} parent=27 // pred_check
          %p1355 = pneg %p157
        $region46: #{tpu_custom_call.1} parent=27 // pred_check_branch
          %1357 = sbr.rel (%p1355) target = $region48
        $region47: #{tpu_custom_call.1} parent=27 // pred_region
          _
        $region48: #{tpu_custom_call.1} parent=27 // pred_fallthru
          _
        // Predicated region
        $region49: #{tpu_custom_call.1} parent=27 // pred_check
          %p1358 = pneg %p185
        $region50: #{tpu_custom_call.1} parent=27 // pred_check_branch
          %1360 = sbr.rel (%p1358) target = $region52
        $region51: #{tpu_custom_call.1} parent=27 // pred_region
          _
        $region52: #{tpu_custom_call.1} parent=27 // pred_fallthru
          _
        // Predicated region
        $region53: #{tpu_custom_call.1} parent=27 // pred_check
          %p1361 = pneg %p213
        $region54: #{tpu_custom_call.1} parent=27 // pred_check_branch
          %1363 = sbr.rel (%p1361) target = $region56
        $region55: #{tpu_custom_call.1} parent=27 // pred_region
          _
        $region56: #{tpu_custom_call.1} parent=27 // pred_fallthru
          _
      $region28: #{tpu_custom_call.1} parent=5 // pred_fallthru
        _
      %p1364 = scmp.le.s32.totalorder 2, %s21
      // Predicated region
      $region57: #{tpu_custom_call.1} parent=5 // pred_check
        %p1365 = pneg %p1364
      $region58: #{tpu_custom_call.1} parent=5 // pred_check_branch
        %1367 = sbr.rel (%p1365) target = $region60
      $region59: #{tpu_custom_call.1} parent=5 // pred_region
        %s1368 = ssub.s32 %s21, 2
        // Predicated region
        $region61: #{tpu_custom_call.1} parent=59 // pred_check
          %p1369 = pneg %p135
        $region62: #{tpu_custom_call.1} parent=59 // pred_check_branch
          %1371 = sbr.rel (%p1369) target = $region64
        $region63: #{tpu_custom_call.1} parent=59 // pred_region
          %s1372 = sand.u32 %s120, 1
          %s1373 = scalar_lea.sflag [#allocation4], %s1372
          %s1374 = sand.u32 %s120, 1
          %s1375 = smul.addr %s1374, 8
          %s1376 = scalar_lea.vmem [#allocation7], %s1375
          %1377 = dma.done %s1373, 128
        $region64: #{tpu_custom_call.1} parent=59 // pred_fallthru
          _
        // Predicated region
        $region65: #{tpu_custom_call.1} parent=59 // pred_check
          %p1378 = pneg %p163
        $region66: #{tpu_custom_call.1} parent=59 // pred_check_branch
          %1380 = sbr.rel (%p1378) target = $region68
        $region67: #{tpu_custom_call.1} parent=59 // pred_region
          %p1381 = scmp.lt.s32.totalorder %s35, 0
          %s1382 = scalar_select %p1381, %s35, 0
          %p1383 = scmp.lt.s32.totalorder %s34, 1
          %s1384 = scalar_select %p1383, %s34, 1
          %s1385 = smul.addr %s1382, 2
          %s1386 = sadd.s32 %s1384, %s1385
          %s1387 = smul.addr %s1386, 8
          %s1388 = scalar_lea.vmem %s3, %s1387
        $region68: #{tpu_custom_call.1} parent=59 // pred_fallthru
          _
        // Predicated region
        $region69: #{tpu_custom_call.1} parent=59 // pred_check
          %p1389 = pneg %p191
        $region70: #{tpu_custom_call.1} parent=59 // pred_check_branch
          %1391 = sbr.rel (%p1389) target = $region72
        $region71: #{tpu_custom_call.1} parent=59 // pred_region
          %p1392 = scmp.lt.s32.totalorder %s35, 0
          %s1393 = scalar_select %p1392, %s35, 0
          %p1394 = scmp.lt.s32.totalorder %s34, 1
          %s1395 = scalar_select %p1394, %s34, 1
          %s1396 = smul.addr %s1393, 2
          %s1397 = sadd.s32 %s1395, %s1396
          %s1398 = smul.addr %s1397, 8
          %s1399 = scalar_lea.vmem %s4, %s1398
        $region72: #{tpu_custom_call.1} parent=59 // pred_fallthru
          _
        // Predicated region
        $region73: #{tpu_custom_call.1} parent=59 // pred_check
          %p1400 = pneg %p219
        $region74: #{tpu_custom_call.1} parent=59 // pred_check_branch
          %1402 = sbr.rel (%p1400) target = $region76
        $region75: #{tpu_custom_call.1} parent=59 // pred_region
          %p1403 = scmp.lt.s32.totalorder %s35, 0
          %s1404 = scalar_select %p1403, %s35, 0
          %p1405 = scmp.lt.s32.totalorder %s34, 1
          %s1406 = scalar_select %p1405, %s34, 1
          %s1407 = smul.addr %s1404, 2
          %s1408 = sadd.s32 %s1406, %s1407
          %s1409 = smul.addr %s1408, 4
          %s1410 = scalar_lea.vmem %s5, %s1409
        $region76: #{tpu_custom_call.1} parent=59 // pred_fallthru
          _
      $region60: #{tpu_custom_call.1} parent=5 // pred_fallthru
        _
    $region6: #{tpu_custom_call.1} parent=1 // loop_footer
      %s25 = sadd.s32 1, %s21
    $region7: #{tpu_custom_call.1} parent=1 // loop_footer_branch
      %20 = sbr.rel target = $region3
    $region8: #{tpu_custom_call.1} parent=1 // loop_exit
      _
    %1411 = vsyncpa [#allocation3], 1
    %s1412 = scalar_lea.sflag [#allocation3], 1
    %1413 = vsyncpa %s1412, 1
    %1414 = vsyncpa [#allocation6], 1
    %s1415 = scalar_lea.sflag [#allocation6], 1
    %1416 = vsyncpa %s1415, 1
    %1417 = vsyncpa [#allocation4], 1
    %s1418 = scalar_lea.sflag [#allocation4], 1
    %1419 = vsyncpa %s1418, 1

</llo_original>
